<compile_context>
chip_gen: v7x
topology: tpu7x:2x2x1
jax: 0.10.0
libtpu: 0.0.40
codegen_flags: <defaults>
</compile_context>

<pallas_src>
import jax
import jax.numpy as jnp
from jax.experimental import pallas as pl
from jax.experimental.pallas import tpu as pltpu

_VMEM_LIMIT = 48 * 1024 * 1024


# ---------------- Kernel 1: bottleneck Linear(+folded BN) + ReLU --------------

def _bottleneck_kernel(x_ref, w_ref, shift_ref, o32_ref, o16_ref):
    # bf16 x bf16 -> f32 on the MXU; BN scale is folded into w, bias+BN shift
    # into `shift` (done once in the wrapper), so the epilogue is one add + relu.
    y = jnp.dot(x_ref[...], w_ref[...], preferred_element_type=jnp.float32)
    y = jnp.maximum(y + shift_ref[...], 0.0)
    o32_ref[...] = y                          # f32 `features` output
    o16_ref[...] = y.astype(jnp.bfloat16)     # bf16 copy feeding the conv MXU


def bottleneck_forward(x_bf16, w_bf16, shift_f32, *, tile_n=512):
    n, cin = x_bf16.shape
    d = w_bf16.shape[1]
    tn = min(tile_n, n)
    return pl.pallas_call(
        _bottleneck_kernel,
        out_shape=(jax.ShapeDtypeStruct((n, d), jnp.float32),
                   jax.ShapeDtypeStruct((n, d), jnp.bfloat16)),
        grid=(pl.cdiv(n, tn),),
        in_specs=[
            pl.BlockSpec((tn, cin), lambda i: (i, 0)),
            pl.BlockSpec((cin, d), lambda i: (0, 0)),
            pl.BlockSpec((1, d), lambda i: (0, 0)),
        ],
        out_specs=(
            pl.BlockSpec((tn, d), lambda i: (i, 0)),
            pl.BlockSpec((tn, d), lambda i: (i, 0)),
        ),
        compiler_params=pltpu.CompilerParams(
            dimension_semantics=("parallel",),
            vmem_limit_bytes=_VMEM_LIMIT),
    )(x_bf16, w_bf16, shift_f32)


# ------- Kernel 2: fused Classifier_Module_1 + Classifier_Module_2 + softmax --
# Each module computes conv3x3(d=6)(x) + conv3x3(d=12)(x).  Both modules see the
# same input (GRL forward is identity), so we fuse them: one wide matmul
# (HW, C) x (C, 18 * 2*nc) computes every tap of every dilation of both modules,
# then a shift-and-add epilogue with border masks assembles the conv outputs.

def _make_fused_conv_kernel(H, W, nc, shifts):
    HW = H * W
    G = 2 * nc                      # per shift group: [module-1 tap | module-2 tap]

    def kernel(x_ref, w_ref, b_ref, col_ref, o1_ref, osm_ref, o2_ref,
               p_ref, acc_ref):
        # One wide, lane-dense MXU pass for all 18 taps of both modules.
        p_ref[...] = jnp.dot(x_ref[...], w_ref[...],
                             preferred_element_type=jnp.float32)

        # Conv biases (summed over the two dilations of each module, matching
        # out = conv_d6(x) + conv_d12(x)).
        acc_ref[...] = jnp.broadcast_to(b_ref[...], (HW, G))

        # Shift-and-add epilogue on the small per-tap (rows, G) slices of P.
        # Output row r accumulates P[r + dy*W + dx] when (y+dy, x+dx) is in-bounds.
        for s, (dy, dx) in enumerate(shifts):
            if dy <= -H or dy >= H or dx <= -W or dx >= W:
                continue            # this tap only ever reads zero padding
            off = dy * W + dx
            rs, re = max(0, -off), min(HW, HW - off)
            if re <= rs:
                continue
            pt = p_ref[rs + off:re + off, s * G:(s + 1) * G]
            if dx != 0:             # mask pixels whose x-tap falls outside [0, W)
                c = col_ref[rs:re, :]
                pt = jnp.where((c + dx >= 0) & (c + dx < W), pt, 0.0)
            acc_ref[rs:re, :] += pt

        out = acc_ref[...]
        o1 = out[:, :nc]            # classifier_layer_1_conv2d -> outputs
        o2 = out[:, nc:]            # classifier_layer_2_conv2d -> outputs_adv
        o1_ref[...] = o1
        o2_ref[...] = o2
        # Fused channel softmax on classifier-1 logits (saves an HBM round trip).
        m = jnp.max(o1, axis=-1, keepdims=True)
        e = jnp.exp(o1 - m)
        osm_ref[...] = e / jnp.sum(e, axis=-1, keepdims=True)

    return kernel


def fused_classifier_forward(feat_bhwc16, w_wide, bias, col, shifts, nc, H, W):
    B, HW, C = feat_bhwc16.shape
    G = 2 * nc
    K = w_wide.shape[1]
    kernel = _make_fused_conv_kernel(H, W, nc, shifts)
    out_sds = jax.ShapeDtypeStruct((B, HW, nc), jnp.float32)

    def out_spec():
        return pl.BlockSpec((None, HW, nc), lambda b: (b, 0, 0))

    return pl.pallas_call(
        kernel,
        out_shape=(out_sds, out_sds, out_sds),
        grid=(B,),
        in_specs=[
            pl.BlockSpec((None, HW, C), lambda b: (b, 0, 0)),
            pl.BlockSpec((C, K), lambda b: (0, 0)),
            pl.BlockSpec((1, G), lambda b: (0, 0)),
            pl.BlockSpec((HW, 1), lambda b: (0, 0)),
        ],
        out_specs=(out_spec(), out_spec(), out_spec()),
        scratch_shapes=[pltpu.VMEM((HW, K), jnp.float32),   # wide matmul result
                        pltpu.VMEM((HW, G), jnp.float32)],  # fused accumulator
        compiler_params=pltpu.CompilerParams(
            dimension_semantics=("parallel",),
            vmem_limit_bytes=_VMEM_LIMIT),
    )(feat_bhwc16, w_wide, bias, col)


def _fuse_conv_weights(w1, b1, w2, b2, dilations):
    """Build the wide matmul weight for BOTH classifier modules.

    w*: (n_dil, nc, C, 3, 3) PyTorch-layout conv weights; b*: (n_dil, nc).
    Columns are grouped by (dilation, ky, kx); each group holds module 1's
    (C, nc) tap followed by module 2's.
    """
    cols, shifts = [], []
    for di, d in enumerate(dilations):
        for ky in range(3):
            for kx in range(3):
                shifts.append(((ky - 1) * d, (kx - 1) * d))
                t1 = w1[di, :, :, ky, kx].T          # (C, nc)
                t2 = w2[di, :, :, ky, kx].T
                cols.append(jnp.concatenate([t1, t2], axis=1))
    w_wide = jnp.concatenate(cols, axis=1).astype(jnp.bfloat16)   # (C, 18*2nc)
    bias = jnp.concatenate([b1.sum(axis=0), b2.sum(axis=0)])[None, :]  # (1, 2nc)
    return w_wide, bias, tuple(shifts)


# ------------------------------ parameters ------------------------------------

def init_params(key, cin, bottleneck_dim, num_classes, dilations=(6, 12)):
    keys = jax.random.split(key, 3)
    # bottleneck Linear: weight.normal_(0, 0.005), bias.fill_(0.1)
    w_bott = jax.random.normal(keys[0], (bottleneck_dim, cin), jnp.float32) * 0.005
    b_bott = jnp.full((bottleneck_dim,), 0.1, jnp.float32)
    # BatchNorm1d defaults, eval mode
    gamma = jnp.ones((bottleneck_dim,), jnp.float32)
    beta = jnp.zeros((bottleneck_dim,), jnp.float32)
    running_mean = jnp.zeros((bottleneck_dim,), jnp.float32)
    running_var = jnp.ones((bottleneck_dim,), jnp.float32)

    def conv_module_params(k):
        # Conv2d weight.normal_(0, 0.01); bias keeps default U(-1/sqrt(fan_in), +)
        kw, kb = jax.random.split(k)
        fan_in = bottleneck_dim * 9
        bound = 1.0 / (fan_in ** 0.5)
        w = jax.random.normal(
            kw, (len(dilations), num_classes, bottleneck_dim, 3, 3),
            jnp.float32) * 0.01
        b = jax.random.uniform(kb, (len(dilations), num_classes), jnp.float32,
                               minval=-bound, maxval=bound)
        return w, b

    w_conv1, b_conv1 = conv_module_params(keys[1])
    w_conv2, b_conv2 = conv_module_params(keys[2])
    return dict(w_bott=w_bott, b_bott=b_bott, gamma=gamma, beta=beta,
                running_mean=running_mean, running_var=running_var,
                w_conv1=w_conv1, b_conv1=b_conv1,
                w_conv2=w_conv2, b_conv2=b_conv2)


# ------------------------------ MDDNet forward --------------------------------

@jax.jit
def mddnet_forward(features_nchw, params):
    B, cin, H, W = features_nchw.shape
    nc = params["b_conv1"].shape[-1]
    dilations = (6, 12)   # only the first two convs of Classifier_Module ever run

    # trans(): NCHW -> (B*H*W, Cin); cast to bf16 fused into the transpose pass.
    x_flat = jnp.transpose(features_nchw, (0, 2, 3, 1)).reshape(B * H * W, cin)
    x_bf16 = x_flat.astype(jnp.bfloat16)

    # Fold Linear bias + BatchNorm1d(eval) into the weight and one shift vector.
    eps = 1e-5
    scale = params["gamma"] * jax.lax.rsqrt(params["running_var"] + eps)
    shift = (params["b_bott"] - params["running_mean"]) * scale + params["beta"]
    w_eff = (params["w_bott"].T * scale[None, :]).astype(jnp.bfloat16)

    feat32_flat, feat16_flat = bottleneck_forward(x_bf16, w_eff, shift[None, :])
    D = feat32_flat.shape[1]

    # detrans(): `features` output in NCHW (PyTorch semantics).
    features = jnp.transpose(feat32_flat.reshape(B, H, W, D), (0, 3, 1, 2))

    # GradientReverseLayer forward is identity -> both classifier modules see the
    # same feature map; fuse them (and the channel softmax) into one kernel.
    w_wide, bias_fused, shifts = _fuse_conv_weights(
        params["w_conv1"], params["b_conv1"],
        params["w_conv2"], params["b_conv2"], dilations)
    col = (jnp.arange(H * W, dtype=jnp.int32) % W).reshape(H * W, 1)

    o1, osm, o2 = fused_classifier_forward(
        feat16_flat.reshape(B, H * W, D), w_wide, bias_fused, col,
        shifts, nc, H, W)

    def to_nchw(t):
        return jnp.transpose(t.reshape(B, H, W, nc), (0, 3, 1, 2))

    return features, to_nchw(o1), to_nchw(osm), to_nchw(o2)


# ------------------------------ pure-JAX reference ----------------------------

def _reference_forward(x_nchw, params, dilations=(6, 12)):
    B, cin, H, W = x_nchw.shape
    xf = jnp.transpose(x_nchw, (0, 2, 3, 1)).reshape(B * H * W, cin)
    y = xf @ params["w_bott"].T + params["b_bott"]
    scale = params["gamma"] / jnp.sqrt(params["running_var"] + 1e-5)
    y = (y - params["running_mean"]) * scale + params["beta"]
    y = jnp.maximum(y, 0.0)
    D = y.shape[1]
    feats = jnp.transpose(y.reshape(B, H, W, D), (0, 3, 1, 2))

    def cmod(feat, w, b):
        out = 0.0
        for di, d in enumerate(dilations):
            out = out + jax.lax.conv_general_dilated(
                feat, w[di], window_strides=(1, 1),
                padding=[(d, d), (d, d)], rhs_dilation=(d, d),
                dimension_numbers=("NCHW", "OIHW", "NCHW"),
            ) + b[di][None, :, None, None]
        return out

    outs = cmod(feats, params["w_conv1"], params["b_conv1"])
    outs_adv = cmod(feats, params["w_conv2"], params["b_conv2"])
    soft = jax.nn.softmax(outs, axis=1)
    return feats, outs, soft, outs_adv


if __name__ == "__main__":
    key = jax.random.PRNGKey(0)
    B, Cin, H, W = 2, 32, 8, 8          # backbone feature map (small synthetic)
    bottleneck_dim = 64
    num_classes = 8

    k_x, k_p = jax.random.split(key)
    x = jax.random.normal(k_x, (B, Cin, H, W), jnp.float32)
    params = init_params(k_p, Cin, bottleneck_dim, num_classes)

    feats, outs, soft, outs_adv = mddnet_forward(x, params)
    jax.block_until_ready((feats, outs, soft, outs_adv))

    assert feats.shape == (B, bottleneck_dim, H, W)
    assert outs.shape == (B, num_classes, H, W)
    assert soft.shape == (B, num_classes, H, W)
    assert outs_adv.shape == (B, num_classes, H, W)

    # Numerical check against a pure-JAX reference (bf16 matmuls -> loose tol).
    r_feats, r_outs, r_soft, r_outs_adv = _reference_forward(x, params)
    assert bool(jnp.allclose(feats, r_feats, atol=2e-2, rtol=2e-2))
    assert bool(jnp.allclose(outs, r_outs, atol=2e-2, rtol=2e-2))
    assert bool(jnp.allclose(soft, r_soft, atol=2e-2, rtol=2e-2))
    assert bool(jnp.allclose(outs_adv, r_outs_adv, atol=2e-2, rtol=2e-2))
    assert bool(jnp.allclose(soft.sum(axis=1), 1.0, atol=1e-3))

    print("KERNEL_OK")
</pallas_src>

<mosaic_0001>
module attributes {stable_mosaic.version = 11 : i64} {
  func.func @_bottleneck_kernel(%arg0: i32, %arg1: memref<128x32xbf16, #tpu.memory_space<vmem>>, %arg2: memref<32x64xbf16, #tpu.memory_space<vmem>>, %arg3: memref<1x64xf32, #tpu.memory_space<vmem>>, %arg4: memref<128x64xf32, #tpu.memory_space<vmem>>, %arg5: memref<128x64xbf16, #tpu.memory_space<vmem>>) attributes {dimension_semantics = [#tpu.dimension_semantics<parallel>], iteration_bounds = array<i64: 1>, scalar_prefetch = 0 : i64, scratch_operands = 0 : i64, tpu.core_type = #tpu.core_type<tc>, window_params = [{transform_indices = @transform_0, window_bounds = array<i64: 128, 32>}, {pipeline_mode = #tpu.pipeline_mode<synchronous>, transform_indices = @transform_1, window_bounds = array<i64: 32, 64>}, {pipeline_mode = #tpu.pipeline_mode<synchronous>, transform_indices = @transform_2, window_bounds = array<i64: 1, 64>}, {transform_indices = @transform_3, window_bounds = array<i64: 128, 64>}, {transform_indices = @transform_4, window_bounds = array<i64: 128, 64>}]} {
    %c0 = arith.constant 0 : index
    %c0_0 = arith.constant 0 : index
    %0 = vector.load %arg1[%c0, %c0_0] : memref<128x32xbf16, #tpu.memory_space<vmem>>, vector<128x32xbf16>
    %c0_1 = arith.constant 0 : index
    %c0_2 = arith.constant 0 : index
    %1 = vector.load %arg2[%c0_1, %c0_2] : memref<32x64xbf16, #tpu.memory_space<vmem>>, vector<32x64xbf16>
    %cst = arith.constant dense<0.000000e+00> : vector<128x64xf32>
    %2 = tpu.matmul %0, %1, %cst {dimension_numbers = #tpu.dot_dimension_numbers<[1], [0], [0], [1], [0, 0, 1, 1], [], []>} : vector<128x32xbf16>, vector<32x64xbf16>, vector<128x64xf32> -> vector<128x64xf32>
    %c0_3 = arith.constant 0 : index
    %c0_4 = arith.constant 0 : index
    %3 = vector.load %arg3[%c0_3, %c0_4] : memref<1x64xf32, #tpu.memory_space<vmem>>, vector<1x64xf32>
    %4 = vector.broadcast %3 : vector<1x64xf32> to vector<128x64xf32>
    %5 = arith.addf %2, %4 : vector<128x64xf32>
    %cst_5 = arith.constant 0.000000e+00 : f32
    %6 = vector.broadcast %cst_5 : f32 to vector<128x64xf32>
    %7 = arith.maximumf %5, %6 : vector<128x64xf32>
    %c0_6 = arith.constant 0 : index
    %c0_7 = arith.constant 0 : index
    %8 = vector.load %arg4[%c0_6, %c0_7] : memref<128x64xf32, #tpu.memory_space<vmem>>, vector<128x64xf32>
    tpu.vector_store %arg4[%c0_6, %c0_7], %7 {strides = array<i32>} : memref<128x64xf32, #tpu.memory_space<vmem>>, vector<128x64xf32>,
    %9 = arith.truncf %7 : vector<128x64xf32> to vector<128x64xbf16>
    %c0_8 = arith.constant 0 : index
    %c0_9 = arith.constant 0 : index
    %10 = vector.load %arg5[%c0_8, %c0_9] : memref<128x64xbf16, #tpu.memory_space<vmem>>, vector<128x64xbf16>
    tpu.vector_store %arg5[%c0_8, %c0_9], %9 {strides = array<i32>} : memref<128x64xbf16, #tpu.memory_space<vmem>>, vector<128x64xbf16>,
    return
  }
  func.func @transform_0(%arg0: i32) -> (i32, i32) {
    %c0_i32 = arith.constant 0 : i32
    %c0_i32_0 = arith.constant 0 : i32
    return %arg0, %c0_i32 : i32, i32
  }
  func.func @transform_1(%arg0: i32) -> (i32, i32) {
    %c0_i32 = arith.constant 0 : i32
    %c0_i32_0 = arith.constant 0 : i32
    %c0_i32_1 = arith.constant 0 : i32
    return %c0_i32, %c0_i32_0 : i32, i32
  }
  func.func @transform_2(%arg0: i32) -> (i32, i32) {
    %c0_i32 = arith.constant 0 : i32
    %c0_i32_0 = arith.constant 0 : i32
    %c0_i32_1 = arith.constant 0 : i32
    return %c0_i32, %c0_i32_0 : i32, i32
  }
  func.func @transform_3(%arg0: i32) -> (i32, i32) {
    %c0_i32 = arith.constant 0 : i32
    %c0_i32_0 = arith.constant 0 : i32
    return %arg0, %c0_i32 : i32, i32
  }
  func.func @transform_4(%arg0: i32) -> (i32, i32) {
    %c0_i32 = arith.constant 0 : i32
    %c0_i32_0 = arith.constant 0 : i32
    return %arg0, %c0_i32 : i32, i32
  }
}

module attributes {stable_mosaic.version = 11 : i64} {
  func.func @kernel(%arg0: i32, %arg1: memref<1x64x64xbf16, #tpu.memory_space<vmem>>, %arg2: memref<64x288xbf16, #tpu.memory_space<vmem>>, %arg3: memref<1x16xf32, #tpu.memory_space<vmem>>, %arg4: memref<64x1xi32, #tpu.memory_space<vmem>>, %arg5: memref<1x64x8xf32, #tpu.memory_space<vmem>>, %arg6: memref<1x64x8xf32, #tpu.memory_space<vmem>>, %arg7: memref<1x64x8xf32, #tpu.memory_space<vmem>>, %arg8: memref<64x288xf32, #tpu.memory_space<vmem>>, %arg9: memref<64x16xf32, #tpu.memory_space<vmem>>) attributes {dimension_semantics = [#tpu.dimension_semantics<parallel>], iteration_bounds = array<i64: 2>, scalar_prefetch = 0 : i64, scratch_operands = 2 : i64, tpu.core_type = #tpu.core_type<tc>, window_params = [{transform_indices = @transform_0, window_bounds = array<i64: 1, 64, 64>}, {pipeline_mode = #tpu.pipeline_mode<synchronous>, transform_indices = @transform_1, window_bounds = array<i64: 64, 288>}, {pipeline_mode = #tpu.pipeline_mode<synchronous>, transform_indices = @transform_2, window_bounds = array<i64: 1, 16>}, {pipeline_mode = #tpu.pipeline_mode<synchronous>, transform_indices = @transform_3, window_bounds = array<i64: 64, 1>}, {transform_indices = @transform_4, window_bounds = array<i64: 1, 64, 8>}, {transform_indices = @transform_5, window_bounds = array<i64: 1, 64, 8>}, {transform_indices = @transform_6, window_bounds = array<i64: 1, 64, 8>}]} {
    %c0 = arith.constant 0 : index
    %c0_0 = arith.constant 0 : index
    %c0_1 = arith.constant 0 : index
    %0 = vector.load %arg1[%c0, %c0_0, %c0_1] : memref<1x64x64xbf16, #tpu.memory_space<vmem>>, vector<1x64x64xbf16>
    %1 = vector.shape_cast %0 : vector<1x64x64xbf16> to vector<64x64xbf16>
    %c0_2 = arith.constant 0 : index
    %c0_3 = arith.constant 0 : index
    %2 = vector.load %arg2[%c0_2, %c0_3] : memref<64x288xbf16, #tpu.memory_space<vmem>>, vector<64x288xbf16>
    %cst = arith.constant dense<0.000000e+00> : vector<64x288xf32>
    %3 = tpu.matmul %1, %2, %cst {dimension_numbers = #tpu.dot_dimension_numbers<[1], [0], [0], [1], [0, 0, 1, 1], [], []>} : vector<64x64xbf16>, vector<64x288xbf16>, vector<64x288xf32> -> vector<64x288xf32>
    %c0_4 = arith.constant 0 : index
    %c0_5 = arith.constant 0 : index
    %4 = vector.load %arg8[%c0_4, %c0_5] : memref<64x288xf32, #tpu.memory_space<vmem>>, vector<64x288xf32>
    tpu.vector_store %arg8[%c0_4, %c0_5], %3 {strides = array<i32>} : memref<64x288xf32, #tpu.memory_space<vmem>>, vector<64x288xf32>,
    %c0_6 = arith.constant 0 : index
    %c0_7 = arith.constant 0 : index
    %5 = vector.load %arg3[%c0_6, %c0_7] : memref<1x16xf32, #tpu.memory_space<vmem>>, vector<1x16xf32>
    %6 = vector.shape_cast %5 : vector<1x16xf32> to vector<1x16xf32>
    %7 = vector.broadcast %6 : vector<1x16xf32> to vector<64x16xf32>
    %c0_8 = arith.constant 0 : index
    %c0_9 = arith.constant 0 : index
    %8 = vector.load %arg9[%c0_8, %c0_9] : memref<64x16xf32, #tpu.memory_space<vmem>>, vector<64x16xf32>
    tpu.vector_store %arg9[%c0_8, %c0_9], %7 {strides = array<i32>} : memref<64x16xf32, #tpu.memory_space<vmem>>, vector<64x16xf32>,
    %c0_10 = arith.constant 0 : index
    %c0_11 = arith.constant 0 : index
    %9 = vector.load %arg8[%c0_10, %c0_11] : memref<64x288xf32, #tpu.memory_space<vmem>>, vector<10x16xf32>
    %c54 = arith.constant 54 : index
    %c0_12 = arith.constant 0 : index
    %10 = vector.load %arg4[%c54, %c0_12] : memref<64x1xi32, #tpu.memory_space<vmem>>, vector<10x1xi32>
    %c-6_i32 = arith.constant -6 : i32
    %11 = vector.broadcast %c-6_i32 : i32 to vector<10x1xi32>
    %12 = arith.addi %10, %11 : vector<10x1xi32>
    %c0_i32 = arith.constant 0 : i32
    %13 = vector.broadcast %c0_i32 : i32 to vector<10x1xi32>
    %14 = arith.cmpi sge, %12, %13 : vector<10x1xi32>
    %c-6_i32_13 = arith.constant -6 : i32
    %15 = vector.broadcast %c-6_i32_13 : i32 to vector<10x1xi32>
    %16 = arith.addi %10, %15 : vector<10x1xi32>
    %c8_i32 = arith.constant 8 : i32
    %17 = vector.broadcast %c8_i32 : i32 to vector<10x1xi32>
    %18 = arith.cmpi slt, %16, %17 : vector<10x1xi32>
    %19 = arith.andi %14, %18 : vector<10x1xi1>
    %cst_14 = arith.constant 0.000000e+00 : f32
    %20 = vector.shape_cast %19 : vector<10x1xi1> to vector<10x1xi1>
    %21 = vector.broadcast %20 : vector<10x1xi1> to vector<10x16xi1>
    %22 = vector.broadcast %cst_14 : f32 to vector<10x16xf32>
    %23 = arith.select %21, %9, %22 : vector<10x16xi1>, vector<10x16xf32>
    %c54_15 = arith.constant 54 : index
    %c0_16 = arith.constant 0 : index
    %24 = vector.load %arg9[%c54_15, %c0_16] : memref<64x16xf32, #tpu.memory_space<vmem>>, vector<10x16xf32>
    %25 = arith.addf %24, %23 : vector<10x16xf32>
    %c54_17 = arith.constant 54 : index
    %c0_18 = arith.constant 0 : index
    %26 = vector.load %arg9[%c54_17, %c0_18] : memref<64x16xf32, #tpu.memory_space<vmem>>, vector<10x16xf32>
    tpu.vector_store %arg9[%c54_17, %c0_18], %25 {strides = array<i32>} : memref<64x16xf32, #tpu.memory_space<vmem>>, vector<10x16xf32>,
    %c0_19 = arith.constant 0 : index
    %c16 = arith.constant 16 : index
    %27 = vector.load %arg8[%c0_19, %c16] : memref<64x288xf32, #tpu.memory_space<vmem>>, vector<16x16xf32>
    %c48 = arith.constant 48 : index
    %c0_20 = arith.constant 0 : index
    %28 = vector.load %arg9[%c48, %c0_20] : memref<64x16xf32, #tpu.memory_space<vmem>>, vector<16x16xf32>
    %29 = arith.addf %28, %27 : vector<16x16xf32>
    %c48_21 = arith.constant 48 : index
    %c0_22 = arith.constant 0 : index
    %30 = vector.load %arg9[%c48_21, %c0_22] : memref<64x16xf32, #tpu.memory_space<vmem>>, vector<16x16xf32>
    tpu.vector_store %arg9[%c48_21, %c0_22], %29 {strides = array<i32>} : memref<64x16xf32, #tpu.memory_space<vmem>>, vector<16x16xf32>,
    %c0_23 = arith.constant 0 : index
    %c32 = arith.constant 32 : index
    %31 = vector.load %arg8[%c0_23, %c32] : memref<64x288xf32, #tpu.memory_space<vmem>>, vector<22x16xf32>
    %c42 = arith.constant 42 : index
    %c0_24 = arith.constant 0 : index
    %32 = vector.load %arg4[%c42, %c0_24] : memref<64x1xi32, #tpu.memory_space<vmem>>, vector<22x1xi32>
    %c6_i32 = arith.constant 6 : i32
    %33 = vector.broadcast %c6_i32 : i32 to vector<22x1xi32>
    %34 = arith.addi %32, %33 : vector<22x1xi32>
    %c0_i32_25 = arith.constant 0 : i32
    %35 = vector.broadcast %c0_i32_25 : i32 to vector<22x1xi32>
    %36 = arith.cmpi sge, %34, %35 : vector<22x1xi32>
    %c6_i32_26 = arith.constant 6 : i32
    %37 = vector.broadcast %c6_i32_26 : i32 to vector<22x1xi32>
    %38 = arith.addi %32, %37 : vector<22x1xi32>
    %c8_i32_27 = arith.constant 8 : i32
    %39 = vector.broadcast %c8_i32_27 : i32 to vector<22x1xi32>
    %40 = arith.cmpi slt, %38, %39 : vector<22x1xi32>
    %41 = arith.andi %36, %40 : vector<22x1xi1>
    %cst_28 = arith.constant 0.000000e+00 : f32
    %42 = vector.shape_cast %41 : vector<22x1xi1> to vector<22x1xi1>
    %43 = vector.broadcast %42 : vector<22x1xi1> to vector<22x16xi1>
    %44 = vector.broadcast %cst_28 : f32 to vector<22x16xf32>
    %45 = arith.select %43, %31, %44 : vector<22x16xi1>, vector<22x16xf32>
    %c42_29 = arith.constant 42 : index
    %c0_30 = arith.constant 0 : index
    %46 = vector.load %arg9[%c42_29, %c0_30] : memref<64x16xf32, #tpu.memory_space<vmem>>, vector<22x16xf32>
    %47 = arith.addf %46, %45 : vector<22x16xf32>
    %c42_31 = arith.constant 42 : index
    %c0_32 = arith.constant 0 : index
    %48 = vector.load %arg9[%c42_31, %c0_32] : memref<64x16xf32, #tpu.memory_space<vmem>>, vector<22x16xf32>
    tpu.vector_store %arg9[%c42_31, %c0_32], %47 {strides = array<i32>} : memref<64x16xf32, #tpu.memory_space<vmem>>, vector<22x16xf32>,
    %c0_33 = arith.constant 0 : index
    %c48_34 = arith.constant 48 : index
    %49 = vector.load %arg8[%c0_33, %c48_34] : memref<64x288xf32, #tpu.memory_space<vmem>>, vector<58x16xf32>
    %c6 = arith.constant 6 : index
    %c0_35 = arith.constant 0 : index
    %50 = vector.load %arg4[%c6, %c0_35] : memref<64x1xi32, #tpu.memory_space<vmem>>, vector<58x1xi32>
    %c-6_i32_36 = arith.constant -6 : i32
    %51 = vector.broadcast %c-6_i32_36 : i32 to vector<58x1xi32>
    %52 = arith.addi %50, %51 : vector<58x1xi32>
    %c0_i32_37 = arith.constant 0 : i32
    %53 = vector.broadcast %c0_i32_37 : i32 to vector<58x1xi32>
    %54 = arith.cmpi sge, %52, %53 : vector<58x1xi32>
    %c-6_i32_38 = arith.constant -6 : i32
    %55 = vector.broadcast %c-6_i32_38 : i32 to vector<58x1xi32>
    %56 = arith.addi %50, %55 : vector<58x1xi32>
    %c8_i32_39 = arith.constant 8 : i32
    %57 = vector.broadcast %c8_i32_39 : i32 to vector<58x1xi32>
    %58 = arith.cmpi slt, %56, %57 : vector<58x1xi32>
    %59 = arith.andi %54, %58 : vector<58x1xi1>
    %cst_40 = arith.constant 0.000000e+00 : f32
    %60 = vector.shape_cast %59 : vector<58x1xi1> to vector<58x1xi1>
    %61 = vector.broadcast %60 : vector<58x1xi1> to vector<58x16xi1>
    %62 = vector.broadcast %cst_40 : f32 to vector<58x16xf32>
    %63 = arith.select %61, %49, %62 : vector<58x16xi1>, vector<58x16xf32>
    %c6_41 = arith.constant 6 : index
    %c0_42 = arith.constant 0 : index
    %64 = vector.load %arg9[%c6_41, %c0_42] : memref<64x16xf32, #tpu.memory_space<vmem>>, vector<58x16xf32>
    %65 = arith.addf %64, %63 : vector<58x16xf32>
    %c6_43 = arith.constant 6 : index
    %c0_44 = arith.constant 0 : index
    %66 = vector.load %arg9[%c6_43, %c0_44] : memref<64x16xf32, #tpu.memory_space<vmem>>, vector<58x16xf32>
    tpu.vector_store %arg9[%c6_43, %c0_44], %65 {strides = array<i32>} : memref<64x16xf32, #tpu.memory_space<vmem>>, vector<58x16xf32>,
    %c0_45 = arith.constant 0 : index
    %c64 = arith.constant 64 : index
    %67 = vector.load %arg8[%c0_45, %c64] : memref<64x288xf32, #tpu.memory_space<vmem>>, vector<64x16xf32>
    %c0_46 = arith.constant 0 : index
    %c0_47 = arith.constant 0 : index
    %68 = vector.load %arg9[%c0_46, %c0_47] : memref<64x16xf32, #tpu.memory_space<vmem>>, vector<64x16xf32>
    %69 = arith.addf %68, %67 : vector<64x16xf32>
    %c0_48 = arith.constant 0 : index
    %c0_49 = arith.constant 0 : index
    %70 = vector.load %arg9[%c0_48, %c0_49] : memref<64x16xf32, #tpu.memory_space<vmem>>, vector<64x16xf32>
    tpu.vector_store %arg9[%c0_48, %c0_49], %69 {strides = array<i32>} : memref<64x16xf32, #tpu.memory_space<vmem>>, vector<64x16xf32>,
    %c6_50 = arith.constant 6 : index
    %c80 = arith.constant 80 : index
    %71 = vector.load %arg8[%c6_50, %c80] : memref<64x288xf32, #tpu.memory_space<vmem>>, vector<58x16xf32>
    %c0_51 = arith.constant 0 : index
    %c0_52 = arith.constant 0 : index
    %72 = vector.load %arg4[%c0_51, %c0_52] : memref<64x1xi32, #tpu.memory_space<vmem>>, vector<58x1xi32>
    %c6_i32_53 = arith.constant 6 : i32
    %73 = vector.broadcast %c6_i32_53 : i32 to vector<58x1xi32>
    %74 = arith.addi %72, %73 : vector<58x1xi32>
    %c0_i32_54 = arith.constant 0 : i32
    %75 = vector.broadcast %c0_i32_54 : i32 to vector<58x1xi32>
    %76 = arith.cmpi sge, %74, %75 : vector<58x1xi32>
    %c6_i32_55 = arith.constant 6 : i32
    %77 = vector.broadcast %c6_i32_55 : i32 to vector<58x1xi32>
    %78 = arith.addi %72, %77 : vector<58x1xi32>
    %c8_i32_56 = arith.constant 8 : i32
    %79 = vector.broadcast %c8_i32_56 : i32 to vector<58x1xi32>
    %80 = arith.cmpi slt, %78, %79 : vector<58x1xi32>
    %81 = arith.andi %76, %80 : vector<58x1xi1>
    %cst_57 = arith.constant 0.000000e+00 : f32
    %82 = vector.shape_cast %81 : vector<58x1xi1> to vector<58x1xi1>
    %83 = vector.broadcast %82 : vector<58x1xi1> to vector<58x16xi1>
    %84 = vector.broadcast %cst_57 : f32 to vector<58x16xf32>
    %85 = arith.select %83, %71, %84 : vector<58x16xi1>, vector<58x16xf32>
    %c0_58 = arith.constant 0 : index
    %c0_59 = arith.constant 0 : index
    %86 = vector.load %arg9[%c0_58, %c0_59] : memref<64x16xf32, #tpu.memory_space<vmem>>, vector<58x16xf32>
    %87 = arith.addf %86, %85 : vector<58x16xf32>
    %c0_60 = arith.constant 0 : index
    %c0_61 = arith.constant 0 : index
    %88 = vector.load %arg9[%c0_60, %c0_61] : memref<64x16xf32, #tpu.memory_space<vmem>>, vector<58x16xf32>
    tpu.vector_store %arg9[%c0_60, %c0_61], %87 {strides = array<i32>} : memref<64x16xf32, #tpu.memory_space<vmem>>, vector<58x16xf32>,
    %c42_62 = arith.constant 42 : index
    %c96 = arith.constant 96 : index
    %89 = vector.load %arg8[%c42_62, %c96] : memref<64x288xf32, #tpu.memory_space<vmem>>, vector<22x16xf32>
    %c0_63 = arith.constant 0 : index
    %c0_64 = arith.constant 0 : index
    %90 = vector.load %arg4[%c0_63, %c0_64] : memref<64x1xi32, #tpu.memory_space<vmem>>, vector<22x1xi32>
    %c-6_i32_65 = arith.constant -6 : i32
    %91 = vector.broadcast %c-6_i32_65 : i32 to vector<22x1xi32>
    %92 = arith.addi %90, %91 : vector<22x1xi32>
    %c0_i32_66 = arith.constant 0 : i32
    %93 = vector.broadcast %c0_i32_66 : i32 to vector<22x1xi32>
    %94 = arith.cmpi sge, %92, %93 : vector<22x1xi32>
    %c-6_i32_67 = arith.constant -6 : i32
    %95 = vector.broadcast %c-6_i32_67 : i32 to vector<22x1xi32>
    %96 = arith.addi %90, %95 : vector<22x1xi32>
    %c8_i32_68 = arith.constant 8 : i32
    %97 = vector.broadcast %c8_i32_68 : i32 to vector<22x1xi32>
    %98 = arith.cmpi slt, %96, %97 : vector<22x1xi32>
    %99 = arith.andi %94, %98 : vector<22x1xi1>
    %cst_69 = arith.constant 0.000000e+00 : f32
    %100 = vector.shape_cast %99 : vector<22x1xi1> to vector<22x1xi1>
    %101 = vector.broadcast %100 : vector<22x1xi1> to vector<22x16xi1>
    %102 = vector.broadcast %cst_69 : f32 to vector<22x16xf32>
    %103 = arith.select %101, %89, %102 : vector<22x16xi1>, vector<22x16xf32>
    %c0_70 = arith.constant 0 : index
    %c0_71 = arith.constant 0 : index
    %104 = vector.load %arg9[%c0_70, %c0_71] : memref<64x16xf32, #tpu.memory_space<vmem>>, vector<22x16xf32>
    %105 = arith.addf %104, %103 : vector<22x16xf32>
    %c0_72 = arith.constant 0 : index
    %c0_73 = arith.constant 0 : index
    %106 = vector.load %arg9[%c0_72, %c0_73] : memref<64x16xf32, #tpu.memory_space<vmem>>, vector<22x16xf32>
    tpu.vector_store %arg9[%c0_72, %c0_73], %105 {strides = array<i32>} : memref<64x16xf32, #tpu.memory_space<vmem>>, vector<22x16xf32>,
    %c48_74 = arith.constant 48 : index
    %c112 = arith.constant 112 : index
    %107 = vector.load %arg8[%c48_74, %c112] : memref<64x288xf32, #tpu.memory_space<vmem>>, vector<16x16xf32>
    %c0_75 = arith.constant 0 : index
    %c0_76 = arith.constant 0 : index
    %108 = vector.load %arg9[%c0_75, %c0_76] : memref<64x16xf32, #tpu.memory_space<vmem>>, vector<16x16xf32>
    %109 = arith.addf %108, %107 : vector<16x16xf32>
    %c0_77 = arith.constant 0 : index
    %c0_78 = arith.constant 0 : index
    %110 = vector.load %arg9[%c0_77, %c0_78] : memref<64x16xf32, #tpu.memory_space<vmem>>, vector<16x16xf32>
    tpu.vector_store %arg9[%c0_77, %c0_78], %109 {strides = array<i32>} : memref<64x16xf32, #tpu.memory_space<vmem>>, vector<16x16xf32>,
    %c54_79 = arith.constant 54 : index
    %c128 = arith.constant 128 : index
    %111 = vector.load %arg8[%c54_79, %c128] : memref<64x288xf32, #tpu.memory_space<vmem>>, vector<10x16xf32>
    %c0_80 = arith.constant 0 : index
    %c0_81 = arith.constant 0 : index
    %112 = vector.load %arg4[%c0_80, %c0_81] : memref<64x1xi32, #tpu.memory_space<vmem>>, vector<10x1xi32>
    %c6_i32_82 = arith.constant 6 : i32
    %113 = vector.broadcast %c6_i32_82 : i32 to vector<10x1xi32>
    %114 = arith.addi %112, %113 : vector<10x1xi32>
    %c0_i32_83 = arith.constant 0 : i32
    %115 = vector.broadcast %c0_i32_83 : i32 to vector<10x1xi32>
    %116 = arith.cmpi sge, %114, %115 : vector<10x1xi32>
    %c6_i32_84 = arith.constant 6 : i32
    %117 = vector.broadcast %c6_i32_84 : i32 to vector<10x1xi32>
    %118 = arith.addi %112, %117 : vector<10x1xi32>
    %c8_i32_85 = arith.constant 8 : i32
    %119 = vector.broadcast %c8_i32_85 : i32 to vector<10x1xi32>
    %120 = arith.cmpi slt, %118, %119 : vector<10x1xi32>
    %121 = arith.andi %116, %120 : vector<10x1xi1>
    %cst_86 = arith.constant 0.000000e+00 : f32
    %122 = vector.shape_cast %121 : vector<10x1xi1> to vector<10x1xi1>
    %123 = vector.broadcast %122 : vector<10x1xi1> to vector<10x16xi1>
    %124 = vector.broadcast %cst_86 : f32 to vector<10x16xf32>
    %125 = arith.select %123, %111, %124 : vector<10x16xi1>, vector<10x16xf32>
    %c0_87 = arith.constant 0 : index
    %c0_88 = arith.constant 0 : index
    %126 = vector.load %arg9[%c0_87, %c0_88] : memref<64x16xf32, #tpu.memory_space<vmem>>, vector<10x16xf32>
    %127 = arith.addf %126, %125 : vector<10x16xf32>
    %c0_89 = arith.constant 0 : index
    %c0_90 = arith.constant 0 : index
    %128 = vector.load %arg9[%c0_89, %c0_90] : memref<64x16xf32, #tpu.memory_space<vmem>>, vector<10x16xf32>
    tpu.vector_store %arg9[%c0_89, %c0_90], %127 {strides = array<i32>} : memref<64x16xf32, #tpu.memory_space<vmem>>, vector<10x16xf32>,
    %c0_91 = arith.constant 0 : index
    %c208 = arith.constant 208 : index
    %129 = vector.load %arg8[%c0_91, %c208] : memref<64x288xf32, #tpu.memory_space<vmem>>, vector<64x16xf32>
    %c0_92 = arith.constant 0 : index
    %c0_93 = arith.constant 0 : index
    %130 = vector.load %arg9[%c0_92, %c0_93] : memref<64x16xf32, #tpu.memory_space<vmem>>, vector<64x16xf32>
    %131 = arith.addf %130, %129 : vector<64x16xf32>
    %c0_94 = arith.constant 0 : index
    %c0_95 = arith.constant 0 : index
    %132 = vector.load %arg9[%c0_94, %c0_95] : memref<64x16xf32, #tpu.memory_space<vmem>>, vector<64x16xf32>
    tpu.vector_store %arg9[%c0_94, %c0_95], %131 {strides = array<i32>} : memref<64x16xf32, #tpu.memory_space<vmem>>, vector<64x16xf32>,
    %c0_96 = arith.constant 0 : index
    %c0_97 = arith.constant 0 : index
    %133 = vector.load %arg9[%c0_96, %c0_97] : memref<64x16xf32, #tpu.memory_space<vmem>>, vector<64x16xf32>
    %134 = vector.extract_strided_slice %133 {offsets = [0, 0], sizes = [64, 8], strides = [1, 1]} : vector<64x16xf32> to vector<64x8xf32>
    %135 = vector.extract_strided_slice %133 {offsets = [0, 8], sizes = [64, 8], strides = [1, 1]} : vector<64x16xf32> to vector<64x8xf32>
    %c0_98 = arith.constant 0 : index
    %c0_99 = arith.constant 0 : index
    %c0_100 = arith.constant 0 : index
    %136 = vector.load %arg5[%c0_98, %c0_99, %c0_100] : memref<1x64x8xf32, #tpu.memory_space<vmem>>, vector<1x64x8xf32>
    %137 = vector.shape_cast %136 : vector<1x64x8xf32> to vector<64x8xf32>
    %138 = vector.shape_cast %134 : vector<64x8xf32> to vector<1x64x8xf32>
    tpu.vector_store %arg5[%c0_98, %c0_99, %c0_100], %138 {strides = array<i32>} : memref<1x64x8xf32, #tpu.memory_space<vmem>>, vector<1x64x8xf32>,
    %c0_101 = arith.constant 0 : index
    %c0_102 = arith.constant 0 : index
    %c0_103 = arith.constant 0 : index
    %139 = vector.load %arg7[%c0_101, %c0_102, %c0_103] : memref<1x64x8xf32, #tpu.memory_space<vmem>>, vector<1x64x8xf32>
    %140 = vector.shape_cast %139 : vector<1x64x8xf32> to vector<64x8xf32>
    %141 = vector.shape_cast %135 : vector<64x8xf32> to vector<1x64x8xf32>
    tpu.vector_store %arg7[%c0_101, %c0_102, %c0_103], %141 {strides = array<i32>} : memref<1x64x8xf32, #tpu.memory_space<vmem>>, vector<1x64x8xf32>,
    %cst_104 = arith.constant dense<0xFF800000> : vector<64xf32>
    %142 = vector.multi_reduction <maximumf>, %134, %cst_104 [1] : vector<64x8xf32> to vector<64xf32>
    %143 = vector.shape_cast %142 : vector<64xf32> to vector<64x1xf32>
    %144 = vector.broadcast %143 : vector<64x1xf32> to vector<64x8xf32>
    %145 = arith.subf %134, %144 : vector<64x8xf32>
    %146 = math.exp %145 : vector<64x8xf32>
    %cst_105 = arith.constant dense<0.000000e+00> : vector<64xf32>
    %147 = vector.multi_reduction <add>, %146, %cst_105 [1] : vector<64x8xf32> to vector<64xf32>
    %148 = vector.shape_cast %147 : vector<64xf32> to vector<64x1xf32>
    %149 = vector.broadcast %148 : vector<64x1xf32> to vector<64x8xf32>
    %150 = arith.divf %146, %149 : vector<64x8xf32>
    %c0_106 = arith.constant 0 : index
    %c0_107 = arith.constant 0 : index
    %c0_108 = arith.constant 0 : index
    %151 = vector.load %arg6[%c0_106, %c0_107, %c0_108] : memref<1x64x8xf32, #tpu.memory_space<vmem>>, vector<1x64x8xf32>
    %152 = vector.shape_cast %151 : vector<1x64x8xf32> to vector<64x8xf32>
    %153 = vector.shape_cast %150 : vector<64x8xf32> to vector<1x64x8xf32>
    tpu.vector_store %arg6[%c0_106, %c0_107, %c0_108], %153 {strides = array<i32>} : memref<1x64x8xf32, #tpu.memory_space<vmem>>, vector<1x64x8xf32>,
    return
  }
  func.func @transform_0(%arg0: i32) -> (i32, i32, i32) {
    %c0_i32 = arith.constant 0 : i32
    %c0_i32_0 = arith.constant 0 : i32
    %c0_i32_1 = arith.constant 0 : i32
    return %arg0, %c0_i32, %c0_i32_0 : i32, i32, i32
  }
  func.func @transform_1(%arg0: i32) -> (i32, i32) {
    %c0_i32 = arith.constant 0 : i32
    %c0_i32_0 = arith.constant 0 : i32
    %c0_i32_1 = arith.constant 0 : i32
    return %c0_i32, %c0_i32_0 : i32, i32
  }
  func.func @transform_2(%arg0: i32) -> (i32, i32) {
    %c0_i32 = arith.constant 0 : i32
    %c0_i32_0 = arith.constant 0 : i32
    %c0_i32_1 = arith.constant 0 : i32
    return %c0_i32, %c0_i32_0 : i32, i32
  }
  func.func @transform_3(%arg0: i32) -> (i32, i32) {
    %c0_i32 = arith.constant 0 : i32
    %c0_i32_0 = arith.constant 0 : i32
    %c0_i32_1 = arith.constant 0 : i32
    return %c0_i32, %c0_i32_0 : i32, i32
  }
  func.func @transform_4(%arg0: i32) -> (i32, i32, i32) {
    %c0_i32 = arith.constant 0 : i32
    %c0_i32_0 = arith.constant 0 : i32
    %c0_i32_1 = arith.constant 0 : i32
    return %arg0, %c0_i32, %c0_i32_0 : i32, i32, i32
  }
  func.func @transform_5(%arg0: i32) -> (i32, i32, i32) {
    %c0_i32 = arith.constant 0 : i32
    %c0_i32_0 = arith.constant 0 : i32
    %c0_i32_1 = arith.constant 0 : i32
    return %arg0, %c0_i32, %c0_i32_0 : i32, i32, i32
  }
  func.func @transform_6(%arg0: i32) -> (i32, i32, i32) {
    %c0_i32 = arith.constant 0 : i32
    %c0_i32_0 = arith.constant 0 : i32
    %c0_i32_1 = arith.constant 0 : i32
    return %arg0, %c0_i32, %c0_i32_0 : i32, i32, i32
  }
}

</mosaic_0001>

<llo_original>
// kernel: mddnet_forward.2
$region0: #{mddnet_forward.2}
  #allocation0 [shape = 'u32[]', space=smem, size = 0x4, offset = 0x4, fixed_abs, tag = 'smem constant byte address 0x4 - core index']
  #allocation1 [shape = 'u32[144,128]{1,0:T(1,128)}', space=vmem, size = 0x12000, scoped, tag = 'internal scratch']
  %s0 = inlined_call_operand.vmem [shape: bf16[128,32], index: 0, kind: input, shape index: {}]
  %s1 = inlined_call_operand.vmem [shape: bf16[32,64], index: 1, kind: input, shape index: {}]
  %s2 = inlined_call_operand.vmem [shape: f32[1,64], index: 2, kind: input, shape index: {}]
  %s3 = inlined_call_operand.hbm [shape: f32[128,64], index: 3, kind: output, shape index: {0}]
  %s4 = inlined_call_operand.vmem [shape: bf16[128,64], index: 4, kind: output, shape index: {1}]
  %5 = xla_tuple %s3, %s4
  %s6 = sld [smem:[#allocation0]]
  $region30: #{mddnet_forward.2} parent=0
    _
  %s8 = ssub.s32 1, %s6
  %s9 = scalar_select 0, %s8, %s6
  $region1: #{mddnet_forward.2} parent=0
    #allocation2 [shape = 'u8[65536]{0}', space=vmem, size = 0x10000, scoped, tag = 'output window, operand 0, single buffered']
    #allocation3 [shape = 's32[1]{0}', space=sflag, size = 0x4, scoped, tag = 'scoped memory for mddnet_forward.2']
    %10 = vsyncpa [#allocation3], 0
    // Predicated region
    $region2: #{mddnet_forward.2} parent=1 // pred_check
      _
    $region3: #{mddnet_forward.2} parent=1 // pred_check_branch
      %12 = sbr.rel (0) target = $region5
    $region4: #{mddnet_forward.2} parent=1 // pred_region
      _
    $region5: #{mddnet_forward.2} parent=1 // pred_fallthru
      _
    // Predicated region
    $region6: #{mddnet_forward.2} parent=1 // pred_check
      _
    $region7: #{mddnet_forward.2} parent=1 // pred_check_branch
      %14 = sbr.rel (0) target = $region9
    $region8: #{mddnet_forward.2} parent=1 // pred_region
      _
    $region9: #{mddnet_forward.2} parent=1 // pred_fallthru
      _
    // Predicated region
    $region10: #{mddnet_forward.2} parent=1 // pred_check
      _
    $region11: #{mddnet_forward.2} parent=1 // pred_check_branch
      %16 = sbr.rel (0) target = $region13
    $region12: #{mddnet_forward.2} parent=1 // pred_region
      _
    $region13: #{mddnet_forward.2} parent=1 // pred_fallthru
      _
    %v18 = vld [vmem:[%s0] sm:$0xf]
    %v19 = vld [vmem:[%s0 + $0x4] sm:$0xf]
    %v20 = vld [vmem:[%s0 + $0x8] sm:$0xf]
    %v21 = vld [vmem:[%s0 + $0xc] sm:$0xf]
    %v22 = vld [vmem:[%s0 + $0x10] sm:$0xf]
    %v23 = vld [vmem:[%s0 + $0x14] sm:$0xf]
    %v24 = vld [vmem:[%s0 + $0x18] sm:$0xf]
    %v25 = vld [vmem:[%s0 + $0x1c] sm:$0xf]
    %v26 = vld [vmem:[%s0 + $0x20] sm:$0xf]
    %v27 = vld [vmem:[%s0 + $0x24] sm:$0xf]
    %v28 = vld [vmem:[%s0 + $0x28] sm:$0xf]
    %v29 = vld [vmem:[%s0 + $0x2c] sm:$0xf]
    %v30 = vld [vmem:[%s0 + $0x30] sm:$0xf]
    %v31 = vld [vmem:[%s0 + $0x34] sm:$0xf]
    %v32 = vld [vmem:[%s0 + $0x38] sm:$0xf]
    %v33 = vld [vmem:[%s0 + $0x3c] sm:$0xf]
    %v34 = vld [vmem:[%s1] sm:$0xf]
    %v35 = vld [vmem:[%s1 + $0x4] sm:$0xf]
    %v36 = vld [vmem:[%s1 + $0x8] sm:$0xf]
    %v37 = vld [vmem:[%s1 + $0xc] sm:$0xf]
    %v38 = vld [vmem:[%s2] sm:$0x1]
    %v40 = vlaneseq
    %v41 = vshrl.u32 %v40, 7
    %v42 = vsub.s32 0, %v41
    %v43 = vrot.slane %v38, %v42
    %v61 = vunpack.c.l.b16 %v18
    %v62 = vunpack.c.l.b16 %v19
    %v63 = vunpack.c.l.b16 %v20
    %v64 = vunpack.c.l.b16 %v21
    %v65 = vunpack.c.l.b16 %v22
    %v66 = vunpack.c.l.b16 %v23
    %v67 = vunpack.c.l.b16 %v24
    %v68 = vunpack.c.l.b16 %v25
    %v69 = vunpack.c.l.b16 %v26
    %v70 = vunpack.c.l.b16 %v27
    %v71 = vunpack.c.l.b16 %v28
    %v72 = vunpack.c.l.b16 %v29
    %v73 = vunpack.c.l.b16 %v30
    %v74 = vunpack.c.l.b16 %v31
    %v75 = vunpack.c.l.b16 %v32
    %v76 = vunpack.c.l.b16 %v33
    %v77 = vpack.c.b16 %v62, %v61
    %v78 = vpack.c.b16 %v64, %v63
    %v79 = vpack.c.b16 %v66, %v65
    %v80 = vpack.c.b16 %v68, %v67
    %v81 = vpack.c.b16 %v70, %v69
    %v82 = vpack.c.b16 %v72, %v71
    %v83 = vpack.c.b16 %v74, %v73
    %v84 = vpack.c.b16 %v76, %v75
    %v89 = vunpack.c.l.b16 %v34
    %v90 = vunpack.c.l.b16 %v35
    %v91 = vunpack.c.l.b16 %v36
    %v92 = vunpack.c.l.b16 %v37
    %v93 = vpack.c.b16 %v90, %v89
    %v94 = vpack.c.b16 %v92, %v91
    %vm97 = vcmask 261120
    %v99 = vsel %vm97, %v77, 0
    %v102 = vsel %vm97, %v78, 0
    %v105 = vsel %vm97, %v79, 0
    %v108 = vsel %vm97, %v80, 0
    %v111 = vsel %vm97, %v81, 0
    %v114 = vsel %vm97, %v82, 0
    %v117 = vsel %vm97, %v83, 0
    %v120 = vsel %vm97, %v84, 0
    %122 = vmatprep.subr.bf16.mxu0 0
    %123 = vmatpush1.bf16.msra.mxu0 %v93
    %124 = vmatprep.subr.bf16.mxu0 0
    %125 = vmatpush1.bf16.msra.mxu0 %v94
    %126 = vmatprep.subr.bf16.mxu0 0
    %127 = vmatpush1.bf16.msra.mxu0 0
    %128 = vmatprep.subr.bf16.mxu0 0
    %129 = vmatpush1.bf16.msra.mxu0 0
    %130 = vmatprep.subr.bf16.mxu0 0
    %131 = vmatpush1.bf16.msra.mxu0 0
    %132 = vmatprep.subr.bf16.mxu0 0
    %133 = vmatpush1.bf16.msra.mxu0 0
    %134 = vmatprep.subr.bf16.mxu0 0
    %135 = vmatpush1.bf16.msra.mxu0 0
    %136 = vmatprep.subr.bf16.mxu0 0
    %137 = vmatpush1.bf16.msra.mxu0 0
    %138 = vmatprep.subr.bf16.mxu0 0
    %139 = vmatpush1.bf16.msra.mxu0 0
    %140 = vmatprep.subr.bf16.mxu0 0
    %141 = vmatpush1.bf16.msra.mxu0 0
    %142 = vmatprep.subr.bf16.mxu0 0
    %143 = vmatpush1.bf16.msra.mxu0 0
    %144 = vmatprep.subr.bf16.mxu0 0
    %145 = vmatpush1.bf16.msra.mxu0 0
    %146 = vmatprep.subr.bf16.mxu0 0
    %147 = vmatpush1.bf16.msra.mxu0 0
    %148 = vmatprep.subr.bf16.mxu0 0
    %149 = vmatpush1.bf16.msra.mxu0 0
    %150 = vmatprep.subr.bf16.mxu0 0
    %151 = vmatpush1.bf16.msra.mxu0 0
    %152 = vmatprep.subr.bf16.mxu0 0
    %153 = vmatpush1.bf16.msra.mxu0 0
    %154 = vmatprep.mubr.bf16.mxu0 0
    %155 = vmatmul.mubr.bf16.gmra.mrb[0].mxu0 %v99
    %v156 = vpop.f32.mrb[0].mxu0
    %v157 = vadd.f32 %v43, %v156
    %v158 = vpop.f32.mrb[0].mxu0
    %v159 = vpop.f32.mrb[0].mxu0
    %v160 = vadd.f32 %v43, %v159
    %v161 = vpop.f32.mrb[0].mxu0
    %162 = vmatprep.mubr.bf16.mxu0 0
    %163 = vmatmul.mubr.bf16.gmra.mrb[0].mxu0 %v102
    %v164 = vpop.f32.mrb[0].mxu0
    %v165 = vadd.f32 %v43, %v164
    %v166 = vpop.f32.mrb[0].mxu0
    %v167 = vpop.f32.mrb[0].mxu0
    %v168 = vadd.f32 %v43, %v167
    %v169 = vpop.f32.mrb[0].mxu0
    %170 = vmatprep.mubr.bf16.mxu0 0
    %171 = vmatmul.mubr.bf16.gmra.mrb[0].mxu0 %v105
    %v172 = vpop.f32.mrb[0].mxu0
    %v173 = vadd.f32 %v43, %v172
    %v174 = vpop.f32.mrb[0].mxu0
    %v175 = vpop.f32.mrb[0].mxu0
    %v176 = vadd.f32 %v43, %v175
    %v177 = vpop.f32.mrb[0].mxu0
    %178 = vmatprep.mubr.bf16.mxu0 0
    %179 = vmatmul.mubr.bf16.gmra.mrb[0].mxu0 %v108
    %v180 = vpop.f32.mrb[0].mxu0
    %v181 = vadd.f32 %v43, %v180
    %v182 = vpop.f32.mrb[0].mxu0
    %v183 = vpop.f32.mrb[0].mxu0
    %v184 = vadd.f32 %v43, %v183
    %v185 = vpop.f32.mrb[0].mxu0
    %186 = vmatprep.mubr.bf16.mxu0 0
    %187 = vmatmul.mubr.bf16.gmra.mrb[0].mxu0 %v111
    %v188 = vpop.f32.mrb[0].mxu0
    %v189 = vadd.f32 %v43, %v188
    %v190 = vpop.f32.mrb[0].mxu0
    %v191 = vpop.f32.mrb[0].mxu0
    %v192 = vadd.f32 %v43, %v191
    %v193 = vpop.f32.mrb[0].mxu0
    %194 = vmatprep.mubr.bf16.mxu0 0
    %195 = vmatmul.mubr.bf16.gmra.mrb[0].mxu0 %v114
    %v196 = vpop.f32.mrb[0].mxu0
    %v197 = vadd.f32 %v43, %v196
    %v198 = vpop.f32.mrb[0].mxu0
    %v199 = vpop.f32.mrb[0].mxu0
    %v200 = vadd.f32 %v43, %v199
    %v201 = vpop.f32.mrb[0].mxu0
    %202 = vmatprep.mubr.bf16.mxu0 0
    %203 = vmatmul.mubr.bf16.gmra.mrb[0].mxu0 %v117
    %v204 = vpop.f32.mrb[0].mxu0
    %v205 = vadd.f32 %v43, %v204
    %v206 = vpop.f32.mrb[0].mxu0
    %v207 = vpop.f32.mrb[0].mxu0
    %v208 = vadd.f32 %v43, %v207
    %v209 = vpop.f32.mrb[0].mxu0
    %210 = vmatprep.mubr.bf16.mxu0 0
    %211 = vmatmul.mubr.bf16.gmra.mrb[0].mxu0 %v120
    %v212 = vpop.f32.mrb[0].mxu0
    %v213 = vadd.f32 %v43, %v212
    %v214 = vpop.f32.mrb[0].mxu0
    %v215 = vpop.f32.mrb[0].mxu0
    %v216 = vadd.f32 %v43, %v215
    %v217 = vpop.f32.mrb[0].mxu0
    %218 = vdwg.mxu0
    %v219 = vmax.f32 %v157, 0.0
    %v220 = vmax.f32 %v160, 0.0
    %v221 = vmax.f32 %v165, 0.0
    %v222 = vmax.f32 %v168, 0.0
    %v223 = vmax.f32 %v173, 0.0
    %v224 = vmax.f32 %v176, 0.0
    %v225 = vmax.f32 %v181, 0.0
    %v226 = vmax.f32 %v184, 0.0
    %v227 = vmax.f32 %v189, 0.0
    %v228 = vmax.f32 %v192, 0.0
    %v229 = vmax.f32 %v197, 0.0
    %v230 = vmax.f32 %v200, 0.0
    %v231 = vmax.f32 %v205, 0.0
    %v232 = vmax.f32 %v208, 0.0
    %v233 = vmax.f32 %v213, 0.0
    %v234 = vmax.f32 %v216, 0.0
    %vm235 = vcmask 523264
    %236 = vst.msk [vmem:[#allocation2] sm:$0xff] %vm235, %v219
    %237 = vst.msk [vmem:[#allocation2 + $0x8] sm:$0xff] %vm235, %v220
    %238 = vst.msk [vmem:[#allocation2 + $0x10] sm:$0xff] %vm235, %v221
    %239 = vst.msk [vmem:[#allocation2 + $0x18] sm:$0xff] %vm235, %v222
    %240 = vst.msk [vmem:[#allocation2 + $0x20] sm:$0xff] %vm235, %v223
    %241 = vst.msk [vmem:[#allocation2 + $0x28] sm:$0xff] %vm235, %v224
    %242 = vst.msk [vmem:[#allocation2 + $0x30] sm:$0xff] %vm235, %v225
    %243 = vst.msk [vmem:[#allocation2 + $0x38] sm:$0xff] %vm235, %v226
    %244 = vst.msk [vmem:[#allocation2 + $0x40] sm:$0xff] %vm235, %v227
    %245 = vst.msk [vmem:[#allocation2 + $0x48] sm:$0xff] %vm235, %v228
    %246 = vst.msk [vmem:[#allocation2 + $0x50] sm:$0xff] %vm235, %v229
    %247 = vst.msk [vmem:[#allocation2 + $0x58] sm:$0xff] %vm235, %v230
    %248 = vst.msk [vmem:[#allocation2 + $0x60] sm:$0xff] %vm235, %v231
    %249 = vst.msk [vmem:[#allocation2 + $0x68] sm:$0xff] %vm235, %v232
    %250 = vst.msk [vmem:[#allocation2 + $0x70] sm:$0xff] %vm235, %v233
    %251 = vst.msk [vmem:[#allocation2 + $0x78] sm:$0xff] %vm235, %v234
    %v252 = vpack.c.bf16 %v220, %v219
    %v253 = vpack.c.bf16 %v222, %v221
    %v254 = vpack.c.bf16 %v224, %v223
    %v255 = vpack.c.bf16 %v226, %v225
    %v256 = vpack.c.bf16 %v228, %v227
    %v257 = vpack.c.bf16 %v230, %v229
    %v258 = vpack.c.bf16 %v232, %v231
    %v259 = vpack.c.bf16 %v234, %v233
    %v268 = vunpack.c.l.b16 %v252
    %v269 = vunpack.c.h.b16 %v252
    %v270 = vunpack.c.l.b16 %v253
    %v271 = vunpack.c.h.b16 %v253
    %v272 = vunpack.c.l.b16 %v254
    %v273 = vunpack.c.h.b16 %v254
    %v274 = vunpack.c.l.b16 %v255
    %v275 = vunpack.c.h.b16 %v255
    %v276 = vunpack.c.l.b16 %v256
    %v277 = vunpack.c.h.b16 %v256
    %v278 = vunpack.c.l.b16 %v257
    %v279 = vunpack.c.h.b16 %v257
    %v280 = vunpack.c.l.b16 %v258
    %v281 = vunpack.c.h.b16 %v258
    %v282 = vunpack.c.l.b16 %v259
    %v283 = vunpack.c.h.b16 %v259
    %v284 = vpack.c.b16 %v268, %v268
    %v285 = vpack.c.b16 %v269, %v269
    %v286 = vpack.c.b16 %v270, %v270
    %v287 = vpack.c.b16 %v271, %v271
    %v288 = vpack.c.b16 %v272, %v272
    %v289 = vpack.c.b16 %v273, %v273
    %v290 = vpack.c.b16 %v274, %v274
    %v291 = vpack.c.b16 %v275, %v275
    %v292 = vpack.c.b16 %v276, %v276
    %v293 = vpack.c.b16 %v277, %v277
    %v294 = vpack.c.b16 %v278, %v278
    %v295 = vpack.c.b16 %v279, %v279
    %v296 = vpack.c.b16 %v280, %v280
    %v297 = vpack.c.b16 %v281, %v281
    %v298 = vpack.c.b16 %v282, %v282
    %v299 = vpack.c.b16 %v283, %v283
    %vm316 = vcmask 519168
    %317 = vst.msk [vmem:[%s4] sm:$0xf] %vm316, %v284
    %318 = vst.msk [vmem:[%s4 + $0x4] sm:$0xf] %vm316, %v285
    %319 = vst.msk [vmem:[%s4 + $0x8] sm:$0xf] %vm316, %v286
    %320 = vst.msk [vmem:[%s4 + $0xc] sm:$0xf] %vm316, %v287
    %321 = vst.msk [vmem:[%s4 + $0x10] sm:$0xf] %vm316, %v288
    %322 = vst.msk [vmem:[%s4 + $0x14] sm:$0xf] %vm316, %v289
    %323 = vst.msk [vmem:[%s4 + $0x18] sm:$0xf] %vm316, %v290
    %324 = vst.msk [vmem:[%s4 + $0x1c] sm:$0xf] %vm316, %v291
    %325 = vst.msk [vmem:[%s4 + $0x20] sm:$0xf] %vm316, %v292
    %326 = vst.msk [vmem:[%s4 + $0x24] sm:$0xf] %vm316, %v293
    %327 = vst.msk [vmem:[%s4 + $0x28] sm:$0xf] %vm316, %v294
    %328 = vst.msk [vmem:[%s4 + $0x2c] sm:$0xf] %vm316, %v295
    %329 = vst.msk [vmem:[%s4 + $0x30] sm:$0xf] %vm316, %v296
    %330 = vst.msk [vmem:[%s4 + $0x34] sm:$0xf] %vm316, %v297
    %331 = vst.msk [vmem:[%s4 + $0x38] sm:$0xf] %vm316, %v298
    %332 = vst.msk [vmem:[%s4 + $0x3c] sm:$0xf] %vm316, %v299
    // Predicated region
    $region14: #{mddnet_forward.2} parent=1 // pred_check
      _
    $region15: #{mddnet_forward.2} parent=1 // pred_check_branch
      %334 = sbr.rel (0) target = $region17
    $region16: #{mddnet_forward.2} parent=1 // pred_region
      %s336 = ssub.s32 2048, 2048
      %337 = vsyncadd [#allocation3], %s336
      %s338 = sshll.u32 [#allocation2], 4
      %s339 = int_to_ptr.vmem [resolvable:$true] %s338
      %344 = dma.vmem_to_hbm [thread:$0]  %s339, 2048, %s3, [#allocation3], 128, 128, 8
    $region17: #{mddnet_forward.2} parent=1 // pred_fallthru
      _
    // Predicated region
    $region18: #{mddnet_forward.2} parent=1 // pred_check
      _
    $region19: #{mddnet_forward.2} parent=1 // pred_check_branch
      %346 = sbr.rel (0) target = $region21
    $region20: #{mddnet_forward.2} parent=1 // pred_region
      _
    $region21: #{mddnet_forward.2} parent=1 // pred_fallthru
      _
    // Predicated region
    $region22: #{mddnet_forward.2} parent=1 // pred_check
      _
    $region23: #{mddnet_forward.2} parent=1 // pred_check_branch
      %348 = sbr.rel (0) target = $region25
    $region24: #{mddnet_forward.2} parent=1 // pred_region
      %349 = dma.done [#allocation3], 2048
    $region25: #{mddnet_forward.2} parent=1 // pred_fallthru
      _
    // Predicated region
    $region26: #{mddnet_forward.2} parent=1 // pred_check
      _
    $region27: #{mddnet_forward.2} parent=1 // pred_check_branch
      %351 = sbr.rel (0) target = $region29
    $region28: #{mddnet_forward.2} parent=1 // pred_region
      _
    $region29: #{mddnet_forward.2} parent=1 // pred_fallthru
      _
    %352 = vsyncpa [#allocation3], 1

// kernel: mddnet_forward.3
$region0: #{mddnet_forward.3}
  #allocation0 [shape = 'u32[]', space=smem, size = 0x4, offset = 0x4, fixed_abs, tag = 'smem constant byte address 0x4 - core index']
  #allocation1 [shape = 'u32[144,128]{1,0:T(1,128)}', space=vmem, size = 0x12000, scoped, tag = 'internal scratch']
  #allocation2 [shape = 'f32[64,288]{1,0:T(8,128)}', space=vmem, size = 0x18000, scoped, tag = 'scratch operand']
  #allocation3 [shape = 'f32[64,16]{1,0:T(8,128)}', space=vmem, size = 0x8000, scoped, tag = 'scratch operand']
  %s0 = inlined_call_operand.vmem [shape: bf16[2,64,64], index: 0, kind: input, shape index: {}]
  %s1 = inlined_call_operand.vmem [shape: bf16[64,288], index: 1, kind: input, shape index: {}]
  %s2 = inlined_call_operand.vmem [shape: f32[1,16], index: 2, kind: input, shape index: {}]
  %s3 = inlined_call_operand.vmem [shape: s32[64,1], index: 3, kind: input, shape index: {}]
  %s4 = inlined_call_operand.vmem [shape: f32[2,64,8], index: 4, kind: output, shape index: {0}]
  %s5 = inlined_call_operand.vmem [shape: f32[2,64,8], index: 5, kind: output, shape index: {1}]
  %s6 = inlined_call_operand.vmem [shape: f32[2,64,8], index: 6, kind: output, shape index: {2}]
  %7 = xla_tuple %s4, %s5, %s6
  %s8 = sld [smem:[#allocation0]]
  $region65: #{mddnet_forward.3} parent=0
    _
  %s10 = ssub.s32 1, %s8
  %s11 = scalar_select 0, %s10, %s8
  loop: start=0, step=1, limit=4
  $region2: #{mddnet_forward.3} parent=0 // loop_pre_header
    _
  $region3: #{mddnet_forward.3} parent=0 // loop_header
    %s13 = sphi 0, %s17
    %p14 = scmp.ge.s32.totalorder %s13, 4
    %s23 = sphi 0, %s25
    %s26 = sphi 0, %s23
    %s27 = sphi 0, %s26
    %s43 = sphi 0, %s27
    %s47 = sphi 0, %s47
    %s49 = sphi 0, %s47
    %s50 = sphi 0, %s49
    %s64 = sphi 0, %s50
    %s68 = sphi 0, %s68
    %s70 = sphi 0, %s68
    %s71 = sphi 0, %s70
    %s85 = sphi 0, %s71
    %s89 = sphi 0, %s89
    %s91 = sphi 0, %s89
    %s92 = sphi 0, %s91
    %s106 = sphi 0, %s92
    %s112 = sphi 0, %s114
    %s115 = sphi 0, %s112
    %s116 = sphi 0, %s115
    %s132 = sphi 0, %s116
    %s138 = sphi 0, %s140
    %s141 = sphi 0, %s138
    %s142 = sphi 0, %s141
    %s158 = sphi 0, %s142
    %s164 = sphi 0, %s166
    %s167 = sphi 0, %s164
    %s168 = sphi 0, %s167
    %s184 = sphi 0, %s168
  $region4: #{mddnet_forward.3} parent=0 // loop_header_branch
    %16 = sbr.rel (%p14) target = $region8
  $region5: #{mddnet_forward.3} parent=0 // loop_body
    %s18 = ssub.s32 %s13, 1
    %s19 = ssub.s32 %s13, 2
    %s20 = sadd.s32 %s13, 1
    %s21 = ssub.s32 %s13, %s20
    %p22 = scmp.eq.s32.totalorder %s21, 0
    %s24 = sadd.s32 %s23, 1
    %s25 = scalar_select %p22, %s23, %s24
    %p28 = pneg %p22
    %p29 = scmp.eq.s32.totalorder %s13, 1
    %p30 = por %p28, %p29
    %p31 = scmp.ne.s32.totalorder %s23, %s26
    %p32 = scmp.eq.s32.totalorder %s13, 0
    %p33 = por %p31, %p32
    %p34 = scmp.ne.s32.totalorder %s23, %s26
    %p35 = scmp.eq.s32.totalorder %s18, 1
    %p36 = por %p34, %p35
    %p37 = scmp.ne.s32.totalorder %s26, %s27
    %p38 = scmp.eq.s32.totalorder %s18, 0
    %p39 = por %p37, %p38
    %p40 = scmp.ne.s32.totalorder %s26, %s27
    %p41 = scmp.eq.s32.totalorder %s19, 1
    %p42 = por %p40, %p41
    %p44 = scmp.ne.s32.totalorder %s27, %s43
    %p45 = scmp.eq.s32.totalorder %s19, 0
    %p46 = por %p44, %p45
    %s48 = sadd.s32 %s47, 1
    %p51 = scmp.eq.s32.totalorder %s13, 1
    %p52 = scmp.ne.s32.totalorder %s47, %s49
    %p53 = scmp.eq.s32.totalorder %s13, 0
    %p54 = por %p52, %p53
    %p55 = scmp.ne.s32.totalorder %s47, %s49
    %p56 = scmp.eq.s32.totalorder %s18, 1
    %p57 = por %p55, %p56
    %p58 = scmp.ne.s32.totalorder %s49, %s50
    %p59 = scmp.eq.s32.totalorder %s18, 0
    %p60 = por %p58, %p59
    %p61 = scmp.ne.s32.totalorder %s49, %s50
    %p62 = scmp.eq.s32.totalorder %s19, 1
    %p63 = por %p61, %p62
    %p65 = scmp.ne.s32.totalorder %s50, %s64
    %p66 = scmp.eq.s32.totalorder %s19, 0
    %p67 = por %p65, %p66
    %s69 = sadd.s32 %s68, 1
    %p72 = scmp.eq.s32.totalorder %s13, 1
    %p73 = scmp.ne.s32.totalorder %s68, %s70
    %p74 = scmp.eq.s32.totalorder %s13, 0
    %p75 = por %p73, %p74
    %p76 = scmp.ne.s32.totalorder %s68, %s70
    %p77 = scmp.eq.s32.totalorder %s18, 1
    %p78 = por %p76, %p77
    %p79 = scmp.ne.s32.totalorder %s70, %s71
    %p80 = scmp.eq.s32.totalorder %s18, 0
    %p81 = por %p79, %p80
    %p82 = scmp.ne.s32.totalorder %s70, %s71
    %p83 = scmp.eq.s32.totalorder %s19, 1
    %p84 = por %p82, %p83
    %p86 = scmp.ne.s32.totalorder %s71, %s85
    %p87 = scmp.eq.s32.totalorder %s19, 0
    %p88 = por %p86, %p87
    %s90 = sadd.s32 %s89, 1
    %p93 = scmp.eq.s32.totalorder %s13, 1
    %p94 = scmp.ne.s32.totalorder %s89, %s91
    %p95 = scmp.eq.s32.totalorder %s13, 0
    %p96 = por %p94, %p95
    %p97 = scmp.ne.s32.totalorder %s89, %s91
    %p98 = scmp.eq.s32.totalorder %s18, 1
    %p99 = por %p97, %p98
    %p100 = scmp.ne.s32.totalorder %s91, %s92
    %p101 = scmp.eq.s32.totalorder %s18, 0
    %p102 = por %p100, %p101
    %p103 = scmp.ne.s32.totalorder %s91, %s92
    %p104 = scmp.eq.s32.totalorder %s19, 1
    %p105 = por %p103, %p104
    %p107 = scmp.ne.s32.totalorder %s92, %s106
    %p108 = scmp.eq.s32.totalorder %s19, 0
    %p109 = por %p107, %p108
    %s110 = ssub.s32 %s13, %s20
    %p111 = scmp.eq.s32.totalorder %s110, 0
    %s113 = sadd.s32 %s112, 1
    %s114 = scalar_select %p111, %s112, %s113
    %p117 = pneg %p111
    %p118 = scmp.eq.s32.totalorder %s13, 1
    %p119 = por %p117, %p118
    %p120 = scmp.ne.s32.totalorder %s112, %s115
    %p121 = scmp.eq.s32.totalorder %s13, 0
    %p122 = por %p120, %p121
    %p123 = scmp.ne.s32.totalorder %s112, %s115
    %p124 = scmp.eq.s32.totalorder %s18, 1
    %p125 = por %p123, %p124
    %p126 = scmp.ne.s32.totalorder %s115, %s116
    %p127 = scmp.eq.s32.totalorder %s18, 0
    %p128 = por %p126, %p127
    %p129 = scmp.ne.s32.totalorder %s115, %s116
    %p130 = scmp.eq.s32.totalorder %s19, 1
    %p131 = por %p129, %p130
    %p133 = scmp.ne.s32.totalorder %s116, %s132
    %p134 = scmp.eq.s32.totalorder %s19, 0
    %p135 = por %p133, %p134
    %s136 = ssub.s32 %s13, %s20
    %p137 = scmp.eq.s32.totalorder %s136, 0
    %s139 = sadd.s32 %s138, 1
    %s140 = scalar_select %p137, %s138, %s139
    %p143 = pneg %p137
    %p144 = scmp.eq.s32.totalorder %s13, 1
    %p145 = por %p143, %p144
    %p146 = scmp.ne.s32.totalorder %s138, %s141
    %p147 = scmp.eq.s32.totalorder %s13, 0
    %p148 = por %p146, %p147
    %p149 = scmp.ne.s32.totalorder %s138, %s141
    %p150 = scmp.eq.s32.totalorder %s18, 1
    %p151 = por %p149, %p150
    %p152 = scmp.ne.s32.totalorder %s141, %s142
    %p153 = scmp.eq.s32.totalorder %s18, 0
    %p154 = por %p152, %p153
    %p155 = scmp.ne.s32.totalorder %s141, %s142
    %p156 = scmp.eq.s32.totalorder %s19, 1
    %p157 = por %p155, %p156
    %p159 = scmp.ne.s32.totalorder %s142, %s158
    %p160 = scmp.eq.s32.totalorder %s19, 0
    %p161 = por %p159, %p160
    %s162 = ssub.s32 %s13, %s20
    %p163 = scmp.eq.s32.totalorder %s162, 0
    %s165 = sadd.s32 %s164, 1
    %s166 = scalar_select %p163, %s164, %s165
    %p169 = pneg %p163
    %p170 = scmp.eq.s32.totalorder %s13, 1
    %p171 = por %p169, %p170
    %p172 = scmp.ne.s32.totalorder %s164, %s167
    %p173 = scmp.eq.s32.totalorder %s13, 0
    %p174 = por %p172, %p173
    %p175 = scmp.ne.s32.totalorder %s164, %s167
    %p176 = scmp.eq.s32.totalorder %s18, 1
    %p177 = por %p175, %p176
    %p178 = scmp.ne.s32.totalorder %s167, %s168
    %p179 = scmp.eq.s32.totalorder %s18, 0
    %p180 = por %p178, %p179
    %p181 = scmp.ne.s32.totalorder %s167, %s168
    %p182 = scmp.eq.s32.totalorder %s19, 1
    %p183 = por %p181, %p182
    %p185 = scmp.ne.s32.totalorder %s168, %s184
    %p186 = scmp.eq.s32.totalorder %s19, 0
    %p187 = por %p185, %p186
    %p188 = scmp.le.s32.totalorder 1, %s13
    %p189 = scmp.lt.s32.totalorder %s13, 3
    %p190 = pnand %p188, %p189
    %p191 = pneg %p190
    // Predicated region
    $region9: #{mddnet_forward.3} parent=5 // pred_check
      _
    $region10: #{mddnet_forward.3} parent=5 // pred_check_branch
      %193 = sbr.rel (%p190) target = $region12
    $region11: #{mddnet_forward.3} parent=5 // pred_region
      %s194 = ssub.s32 %s13, 1
      // Predicated region
      $region13: #{mddnet_forward.3} parent=11 // pred_check
        %p195 = pneg %p60
      $region14: #{mddnet_forward.3} parent=11 // pred_check_branch
        %197 = sbr.rel (%p195) target = $region16
      $region15: #{mddnet_forward.3} parent=11 // pred_region
        _
      $region16: #{mddnet_forward.3} parent=11 // pred_fallthru
        _
      // Predicated region
      $region17: #{mddnet_forward.3} parent=11 // pred_check
        %p198 = pneg %p81
      $region18: #{mddnet_forward.3} parent=11 // pred_check_branch
        %200 = sbr.rel (%p198) target = $region20
      $region19: #{mddnet_forward.3} parent=11 // pred_region
        _
      $region20: #{mddnet_forward.3} parent=11 // pred_fallthru
        _
      // Predicated region
      $region21: #{mddnet_forward.3} parent=11 // pred_check
        %p201 = pneg %p102
      $region22: #{mddnet_forward.3} parent=11 // pred_check_branch
        %203 = sbr.rel (%p201) target = $region24
      $region23: #{mddnet_forward.3} parent=11 // pred_region
        _
      $region24: #{mddnet_forward.3} parent=11 // pred_fallthru
        _
    $region12: #{mddnet_forward.3} parent=5 // pred_fallthru
      _
    %p204 = scmp.lt.s32.totalorder %s13, 2
    // Predicated region
    $region25: #{mddnet_forward.3} parent=5 // pred_check
      %p205 = pneg %p204
    $region26: #{mddnet_forward.3} parent=5 // pred_check_branch
      %207 = sbr.rel (%p205) target = $region28
    $region27: #{mddnet_forward.3} parent=5 // pred_region
      // Predicated region
      $region29: #{mddnet_forward.3} parent=27 // pred_check
        %p208 = pneg %p33
      $region30: #{mddnet_forward.3} parent=27 // pred_check_branch
        %210 = sbr.rel (%p208) target = $region32
      $region31: #{mddnet_forward.3} parent=27 // pred_region
        %p211 = scmp.lt.s32.totalorder %s13, 1
        %s212 = scalar_select %p211, %s13, 1
        %s213 = smul.addr %s212, 8
        %s214 = smul.addr %s213, 4
        %s215 = scalar_lea.vmem %s0, %s214
      $region32: #{mddnet_forward.3} parent=27 // pred_fallthru
        _
    $region28: #{mddnet_forward.3} parent=5 // pred_fallthru
      _
    %p216 = scmp.le.s32.totalorder 1, %s13
    %p217 = scmp.lt.s32.totalorder %s13, 3
    %p218 = pnand %p216, %p217
    %p219 = pneg %p218
    // Predicated region
    $region33: #{mddnet_forward.3} parent=5 // pred_check
      _
    $region34: #{mddnet_forward.3} parent=5 // pred_check_branch
      %221 = sbr.rel (%p218) target = $region36
    $region35: #{mddnet_forward.3} parent=5 // pred_region
      %s222 = ssub.s32 %s13, 1
      %p223 = scmp.lt.s32.totalorder %s18, 1
      %s224 = scalar_select %p223, %s18, 1
      %s225 = smul.addr %s224, 8
      %s226 = smul.addr %s225, 4
      %s227 = scalar_lea.vmem %s0, %s226
      %p228 = pneg %p39
      %p229 = pneg %p36
      %p230 = pneg %p60
      %p231 = pneg %p57
      %p232 = pneg %p81
      %p233 = pneg %p78
      %p234 = pneg %p102
      %p235 = pneg %p99
      %p236 = pneg %p128
      %p237 = pneg %p125
      %p238 = scmp.lt.s32.totalorder %s18, 1
      %s239 = scalar_select %p238, %s18, 1
      %s240 = smul.addr %s239, 8
      %s241 = smul.addr %s240, 8
      %s242 = scalar_lea.vmem %s4, %s241
      %p243 = pneg %p154
      %p244 = pneg %p151
      %p245 = scmp.lt.s32.totalorder %s18, 1
      %s246 = scalar_select %p245, %s18, 1
      %s247 = smul.addr %s246, 8
      %s248 = smul.addr %s247, 8
      %s249 = scalar_lea.vmem %s5, %s248
      %p250 = pneg %p180
      %p251 = pneg %p177
      %p252 = scmp.lt.s32.totalorder %s18, 1
      %s253 = scalar_select %p252, %s18, 1
      %s254 = smul.addr %s253, 8
      %s255 = smul.addr %s254, 8
      %s256 = scalar_lea.vmem %s6, %s255
      %p257 = scmp.lt.s32.totalorder %s18, 1
      %s258 = scalar_select %p257, %s18, 1
      %s259 = smul.addr %s258, 8
      %s260 = smul.addr %s259, 4
      %s261 = scalar_lea.vmem %s0, %s260
      %p262 = scmp.lt.s32.totalorder %s18, 1
      %s263 = scalar_select %p262, %s18, 1
      %s264 = smul.addr %s263, 8
      %s265 = smul.addr %s264, 8
      %s266 = scalar_lea.vmem %s4, %s265
      %p267 = scmp.lt.s32.totalorder %s18, 1
      %s268 = scalar_select %p267, %s18, 1
      %s269 = smul.addr %s268, 8
      %s270 = smul.addr %s269, 8
      %s271 = scalar_lea.vmem %s5, %s270
      %p272 = scmp.lt.s32.totalorder %s18, 1
      %s273 = scalar_select %p272, %s18, 1
      %s274 = smul.addr %s273, 8
      %s275 = smul.addr %s274, 8
      %s276 = scalar_lea.vmem %s6, %s275
      %v278 = vld [vmem:[%s261] sm:$0xf]
      %v279 = vld [vmem:[%s261 + $0x4] sm:$0xf]
      %v280 = vld [vmem:[%s261 + $0x8] sm:$0xf]
      %v281 = vld [vmem:[%s261 + $0xc] sm:$0xf]
      %v282 = vld [vmem:[%s261 + $0x10] sm:$0xf]
      %v283 = vld [vmem:[%s261 + $0x14] sm:$0xf]
      %v284 = vld [vmem:[%s261 + $0x18] sm:$0xf]
      %v285 = vld [vmem:[%s261 + $0x1c] sm:$0xf]
      %v286 = vld [vmem:[%s1] sm:$0xff]
      %v287 = vld [vmem:[%s1 + $0x8] sm:$0xf]
      %v288 = vld [vmem:[%s1 + $0xc] sm:$0xff]
      %v289 = vld [vmem:[%s1 + $0x14] sm:$0xf]
      %v290 = vld [vmem:[%s1 + $0x18] sm:$0xff]
      %v291 = vld [vmem:[%s1 + $0x20] sm:$0xf]
      %v292 = vld [vmem:[%s1 + $0x24] sm:$0xff]
      %v293 = vld [vmem:[%s1 + $0x2c] sm:$0xf]
      %v294 = vld [vmem:[%s1 + $0x30] sm:$0xff]
      %v295 = vld [vmem:[%s1 + $0x38] sm:$0xf]
      %v296 = vld [vmem:[%s1 + $0x3c] sm:$0xff]
      %v297 = vld [vmem:[%s1 + $0x44] sm:$0xf]
      %v298 = vld [vmem:[%s1 + $0x48] sm:$0xff]
      %v299 = vld [vmem:[%s1 + $0x50] sm:$0xf]
      %v300 = vld [vmem:[%s1 + $0x54] sm:$0xff]
      %v301 = vld [vmem:[%s1 + $0x5c] sm:$0xf]
      %v310 = vunpack.c.l.b16 %v278
      %v311 = vunpack.c.l.b16 %v279
      %v312 = vunpack.c.l.b16 %v280
      %v313 = vunpack.c.l.b16 %v281
      %v314 = vunpack.c.l.b16 %v282
      %v315 = vunpack.c.l.b16 %v283
      %v316 = vunpack.c.l.b16 %v284
      %v317 = vunpack.c.l.b16 %v285
      %v318 = vpack.c.b16 %v311, %v310
      %v319 = vpack.c.b16 %v313, %v312
      %v320 = vpack.c.b16 %v315, %v314
      %v321 = vpack.c.b16 %v317, %v316
      %v338 = vunpack.c.l.b16 %v286
      %v339 = vunpack.c.h.b16 %v286
      %v340 = vunpack.c.l.b16 %v287
      %v341 = vunpack.c.l.b16 %v288
      %v342 = vunpack.c.h.b16 %v288
      %v343 = vunpack.c.l.b16 %v289
      %v344 = vunpack.c.l.b16 %v290
      %v345 = vunpack.c.h.b16 %v290
      %v346 = vunpack.c.l.b16 %v291
      %v347 = vunpack.c.l.b16 %v292
      %v348 = vunpack.c.h.b16 %v292
      %v349 = vunpack.c.l.b16 %v293
      %v350 = vunpack.c.l.b16 %v294
      %v351 = vunpack.c.h.b16 %v294
      %v352 = vunpack.c.l.b16 %v295
      %v353 = vunpack.c.l.b16 %v296
      %v354 = vunpack.c.h.b16 %v296
      %v355 = vunpack.c.l.b16 %v297
      %v356 = vunpack.c.l.b16 %v298
      %v357 = vunpack.c.h.b16 %v298
      %v358 = vunpack.c.l.b16 %v299
      %v359 = vunpack.c.l.b16 %v300
      %v360 = vunpack.c.h.b16 %v300
      %v361 = vunpack.c.l.b16 %v301
      %v362 = vpack.c.b16 %v341, %v338
      %v363 = vpack.c.b16 %v342, %v339
      %v364 = vpack.c.b16 %v343, %v340
      %v365 = vpack.c.b16 %v347, %v344
      %v366 = vpack.c.b16 %v348, %v345
      %v367 = vpack.c.b16 %v349, %v346
      %v368 = vpack.c.b16 %v353, %v350
      %v369 = vpack.c.b16 %v354, %v351
      %v370 = vpack.c.b16 %v355, %v352
      %v371 = vpack.c.b16 %v359, %v356
      %v372 = vpack.c.b16 %v360, %v357
      %v373 = vpack.c.b16 %v361, %v358
      %vm386 = vcmask 523264
      %v388 = vsel %vm386, %v318, 0
      %v391 = vsel %vm386, %v319, 0
      %v394 = vsel %vm386, %v320, 0
      %v397 = vsel %vm386, %v321, 0
      %399 = vmatprep.subr.bf16.mxu0 %v363
      %400 = vmatpush1.bf16.msra.mxu0 %v362
      %401 = vmatprep.subr.bf16.mxu0 %v366
      %402 = vmatpush1.bf16.msra.mxu0 %v365
      %403 = vmatprep.subr.bf16.mxu0 %v369
      %404 = vmatpush1.bf16.msra.mxu0 %v368
      %405 = vmatprep.subr.bf16.mxu0 %v372
      %406 = vmatpush1.bf16.msra.mxu0 %v371
      %407 = vmatprep.subr.bf16.mxu0 0
      %408 = vmatpush1.bf16.msra.mxu0 0
      %409 = vmatprep.subr.bf16.mxu0 0
      %410 = vmatpush1.bf16.msra.mxu0 0
      %411 = vmatprep.subr.bf16.mxu0 0
      %412 = vmatpush1.bf16.msra.mxu0 0
      %413 = vmatprep.subr.bf16.mxu0 0
      %414 = vmatpush1.bf16.msra.mxu0 0
      %415 = vmatprep.subr.bf16.mxu0 0
      %416 = vmatpush1.bf16.msra.mxu0 0
      %417 = vmatprep.subr.bf16.mxu0 0
      %418 = vmatpush1.bf16.msra.mxu0 0
      %419 = vmatprep.subr.bf16.mxu0 0
      %420 = vmatpush1.bf16.msra.mxu0 0
      %421 = vmatprep.subr.bf16.mxu0 0
      %422 = vmatpush1.bf16.msra.mxu0 0
      %423 = vmatprep.subr.bf16.mxu0 0
      %424 = vmatpush1.bf16.msra.mxu0 0
      %425 = vmatprep.subr.bf16.mxu0 0
      %426 = vmatpush1.bf16.msra.mxu0 0
      %427 = vmatprep.subr.bf16.mxu0 0
      %428 = vmatpush1.bf16.msra.mxu0 0
      %429 = vmatprep.subr.bf16.mxu0 0
      %430 = vmatpush1.bf16.msra.mxu0 0
      %431 = vmatprep.mubr.bf16.mxu0 0
      %432 = vmatmul.mubr.bf16.gmra.mrb[0].mxu0 %v388
      %v433 = vpop.f32.mrb[0].mxu0
      %v434 = vadd.f32 0.0, %v433
      %v435 = vpop.f32.mrb[0].mxu0
      %v436 = vadd.f32 0.0, %v435
      %v437 = vpop.f32.mrb[0].mxu0
      %v438 = vadd.f32 0.0, %v437
      %v439 = vpop.f32.mrb[0].mxu0
      %v440 = vadd.f32 0.0, %v439
      %441 = vmatprep.mubr.bf16.mxu0 0
      %442 = vmatmul.mubr.bf16.gmra.mrb[0].mxu0 %v391
      %v443 = vpop.f32.mrb[0].mxu0
      %v444 = vadd.f32 0.0, %v443
      %v445 = vpop.f32.mrb[0].mxu0
      %v446 = vadd.f32 0.0, %v445
      %v447 = vpop.f32.mrb[0].mxu0
      %v448 = vadd.f32 0.0, %v447
      %v449 = vpop.f32.mrb[0].mxu0
      %v450 = vadd.f32 0.0, %v449
      %451 = vmatprep.mubr.bf16.mxu0 0
      %452 = vmatmul.mubr.bf16.gmra.mrb[0].mxu0 %v394
      %v453 = vpop.f32.mrb[0].mxu0
      %v454 = vadd.f32 0.0, %v453
      %v455 = vpop.f32.mrb[0].mxu0
      %v456 = vadd.f32 0.0, %v455
      %v457 = vpop.f32.mrb[0].mxu0
      %v458 = vadd.f32 0.0, %v457
      %v459 = vpop.f32.mrb[0].mxu0
      %v460 = vadd.f32 0.0, %v459
      %461 = vmatprep.mubr.bf16.mxu0 0
      %462 = vmatmul.mubr.bf16.gmra.mrb[0].mxu0 %v397
      %v463 = vpop.f32.mrb[0].mxu0
      %v464 = vadd.f32 0.0, %v463
      %v465 = vpop.f32.mrb[0].mxu0
      %v466 = vadd.f32 0.0, %v465
      %v467 = vpop.f32.mrb[0].mxu0
      %v468 = vadd.f32 0.0, %v467
      %v469 = vpop.f32.mrb[0].mxu0
      %v470 = vadd.f32 0.0, %v469
      %471 = vdwg.mxu0
      %472 = vmatprep.subr.bf16.mxu0 0
      %473 = vmatpush1.bf16.msra.mxu0 %v364
      %474 = vmatprep.subr.bf16.mxu0 0
      %475 = vmatpush1.bf16.msra.mxu0 %v367
      %476 = vmatprep.subr.bf16.mxu0 0
      %477 = vmatpush1.bf16.msra.mxu0 %v370
      %478 = vmatprep.subr.bf16.mxu0 0
      %479 = vmatpush1.bf16.msra.mxu0 %v373
      %480 = vmatprep.subr.bf16.mxu0 0
      %481 = vmatpush1.bf16.msra.mxu0 0
      %482 = vmatprep.subr.bf16.mxu0 0
      %483 = vmatpush1.bf16.msra.mxu0 0
      %484 = vmatprep.subr.bf16.mxu0 0
      %485 = vmatpush1.bf16.msra.mxu0 0
      %486 = vmatprep.subr.bf16.mxu0 0
      %487 = vmatpush1.bf16.msra.mxu0 0
      %488 = vmatprep.subr.bf16.mxu0 0
      %489 = vmatpush1.bf16.msra.mxu0 0
      %490 = vmatprep.subr.bf16.mxu0 0
      %491 = vmatpush1.bf16.msra.mxu0 0
      %492 = vmatprep.subr.bf16.mxu0 0
      %493 = vmatpush1.bf16.msra.mxu0 0
      %494 = vmatprep.subr.bf16.mxu0 0
      %495 = vmatpush1.bf16.msra.mxu0 0
      %496 = vmatprep.subr.bf16.mxu0 0
      %497 = vmatpush1.bf16.msra.mxu0 0
      %498 = vmatprep.subr.bf16.mxu0 0
      %499 = vmatpush1.bf16.msra.mxu0 0
      %500 = vmatprep.subr.bf16.mxu0 0
      %501 = vmatpush1.bf16.msra.mxu0 0
      %502 = vmatprep.subr.bf16.mxu0 0
      %503 = vmatpush1.bf16.msra.mxu0 0
      %504 = vmatprep.mubr.bf16.mxu0 0
      %505 = vmatmul.mubr.bf16.gmra.mrb[0].mxu0 %v388
      %v506 = vpop.f32.mrb[0].mxu0
      %v507 = vadd.f32 0.0, %v506
      %v508 = vpop.f32.mrb[0].mxu0
      %v509 = vpop.f32.mrb[0].mxu0
      %v510 = vadd.f32 0.0, %v509
      %v511 = vpop.f32.mrb[0].mxu0
      %512 = vmatprep.mubr.bf16.mxu0 0
      %513 = vmatmul.mubr.bf16.gmra.mrb[0].mxu0 %v391
      %v514 = vpop.f32.mrb[0].mxu0
      %v515 = vadd.f32 0.0, %v514
      %v516 = vpop.f32.mrb[0].mxu0
      %v517 = vpop.f32.mrb[0].mxu0
      %v518 = vadd.f32 0.0, %v517
      %v519 = vpop.f32.mrb[0].mxu0
      %520 = vmatprep.mubr.bf16.mxu0 0
      %521 = vmatmul.mubr.bf16.gmra.mrb[0].mxu0 %v394
      %v522 = vpop.f32.mrb[0].mxu0
      %v523 = vadd.f32 0.0, %v522
      %v524 = vpop.f32.mrb[0].mxu0
      %v525 = vpop.f32.mrb[0].mxu0
      %v526 = vadd.f32 0.0, %v525
      %v527 = vpop.f32.mrb[0].mxu0
      %528 = vmatprep.mubr.bf16.mxu0 0
      %529 = vmatmul.mubr.bf16.gmra.mrb[0].mxu0 %v397
      %v530 = vpop.f32.mrb[0].mxu0
      %v531 = vadd.f32 0.0, %v530
      %v532 = vpop.f32.mrb[0].mxu0
      %v533 = vpop.f32.mrb[0].mxu0
      %v534 = vadd.f32 0.0, %v533
      %v535 = vpop.f32.mrb[0].mxu0
      %536 = vdwg.mxu0
      %537 = vst [vmem:[#allocation2] sm:$0xff] %v434
      %538 = vst [vmem:[#allocation2 + $0x8] sm:$0xff] %v436
      %vm539 = vcmask 261120
      %540 = vst.msk [vmem:[#allocation2 + $0x10] sm:$0xff] %vm539, %v507
      %541 = vst [vmem:[#allocation2 + $0x18] sm:$0xff] %v438
      %542 = vst [vmem:[#allocation2 + $0x20] sm:$0xff] %v440
      %543 = vst.msk [vmem:[#allocation2 + $0x28] sm:$0xff] %vm539, %v510
      %544 = vst [vmem:[#allocation2 + $0x30] sm:$0xff] %v444
      %545 = vst [vmem:[#allocation2 + $0x38] sm:$0xff] %v446
      %546 = vst.msk [vmem:[#allocation2 + $0x40] sm:$0xff] %vm539, %v515
      %547 = vst [vmem:[#allocation2 + $0x48] sm:$0xff] %v448
      %548 = vst [vmem:[#allocation2 + $0x50] sm:$0xff] %v450
      %549 = vst.msk [vmem:[#allocation2 + $0x58] sm:$0xff] %vm539, %v518
      %550 = vst [vmem:[#allocation2 + $0x60] sm:$0xff] %v454
      %551 = vst [vmem:[#allocation2 + $0x68] sm:$0xff] %v456
      %552 = vst.msk [vmem:[#allocation2 + $0x70] sm:$0xff] %vm539, %v523
      %553 = vst [vmem:[#allocation2 + $0x78] sm:$0xff] %v458
      %554 = vst [vmem:[#allocation2 + $0x80] sm:$0xff] %v460
      %555 = vst.msk [vmem:[#allocation2 + $0x88] sm:$0xff] %vm539, %v526
      %556 = vst [vmem:[#allocation2 + $0x90] sm:$0xff] %v464
      %557 = vst [vmem:[#allocation2 + $0x98] sm:$0xff] %v466
      %558 = vst.msk [vmem:[#allocation2 + $0xa0] sm:$0xff] %vm539, %v531
      %559 = vst [vmem:[#allocation2 + $0xa8] sm:$0xff] %v468
      %560 = vst [vmem:[#allocation2 + $0xb0] sm:$0xff] %v470
      %561 = vst.msk [vmem:[#allocation2 + $0xb8] sm:$0xff] %vm539, %v534
      %v562 = vld [vmem:[%s2] sm:$0x1]
      %v564 = vlaneseq
      %v565 = vshrl.u32 %v564, 7
      %v566 = vsub.s32 0, %v565
      %v567 = vrot.slane %v562, %v566
      %vm569 = vcmask 130048
      %570 = vst.msk [vmem:[#allocation3] sm:$0xff] %vm569, %v567
      %571 = vst.msk [vmem:[#allocation3 + $0x8] sm:$0xff] %vm569, %v567
      %572 = vst.msk [vmem:[#allocation3 + $0x10] sm:$0xff] %vm569, %v567
      %573 = vst.msk [vmem:[#allocation3 + $0x18] sm:$0xff] %vm569, %v567
      %574 = vst.msk [vmem:[#allocation3 + $0x20] sm:$0xff] %vm569, %v567
      %575 = vst.msk [vmem:[#allocation3 + $0x28] sm:$0xff] %vm569, %v567
      %576 = vst.msk [vmem:[#allocation3 + $0x30] sm:$0xff] %vm569, %v567
      %577 = vst.msk [vmem:[#allocation3 + $0x38] sm:$0xff] %vm569, %v567
      %v578 = vld [vmem:[#allocation2] sm:$0xff]
      %v579 = vld [vmem:[#allocation2 + $0x18] sm:$0x3]
      %v580 = vld [vmem:[%s3 + $0x36] sm:$0xff]
      %v581 = vld [vmem:[%s3 + $0x3e] sm:$0x3]
      %v582 = vadd.s32 %v580, 4294967290
      %v583 = vadd.s32 %v581, 4294967290
      %vm584 = vcmp.ge.s32.totalorder %v582, 0
      %vm585 = vcmp.ge.s32.totalorder %v583, 0
      %vm586 = vcmp.lt.s32.totalorder %v582, 8
      %vm587 = vcmp.lt.s32.totalorder %v583, 8
      %vm588 = vmand %vm584, %vm586
      %vm589 = vmand %vm585, %vm587
      %v590 = vsel %vm588, 1, 0
      %v591 = vsel %vm589, 1, 0
      %592 = vset.pattern.permute.xlu0 0
      %593 = vperm.xlu0 %592, %v590
      %v594 = vpop.permute.xlu0 %593
      %595 = vset.pattern.permute.xlu0 0
      %596 = vperm.xlu0 %595, %v591
      %v597 = vpop.permute.xlu0 %596
      %vm598 = vcmp.eq.s32.totalorder %v594, 1
      %vm599 = vcmp.eq.s32.totalorder %v597, 1
      %v600 = vsel %vm598, %v578, 0.0
      %v601 = vsel %vm599, %v579, 0.0
      %v602 = vld [vmem:[#allocation3 + $0x36] sm:$0xff]
      %v603 = vld [vmem:[#allocation3 + $0x3e] sm:$0x3]
      %v604 = vadd.f32 %v602, %v600
      %v605 = vadd.f32 %v603, %v601
      %606 = vst.msk [vmem:[#allocation3 + $0x36] sm:$0xff] %vm569, %v604
      %vm607 = vcmask 123904
      %608 = vst.msk [vmem:[#allocation3 + $0x3e] sm:$0x3] %vm607, %v605
      %v609 = vld [vmem:[#allocation2] sm:$0xff]
      %v610 = vld [vmem:[#allocation2 + $0x18] sm:$0xff]
      %v611 = vld [vmem:[#allocation3 + $0x30] sm:$0xff]
      %v612 = vld [vmem:[#allocation3 + $0x38] sm:$0xff]
      %615 = vrot.lane.b32.xlu0 %v609, 112
      %v616 = vpop.permute.xlu0 %615
      %617 = vrot.lane.b32.xlu0 %v610, 112
      %v618 = vpop.permute.xlu0 %617
      %v621 = vadd.f32 %v611, %v616
      %v622 = vadd.f32 %v612, %v618
      %623 = vst.msk [vmem:[#allocation3 + $0x30] sm:$0xff] %vm569, %v621
      %624 = vst.msk [vmem:[#allocation3 + $0x38] sm:$0xff] %vm569, %v622
      %v625 = vld [vmem:[#allocation2] sm:$0xff]
      %v626 = vld [vmem:[#allocation2 + $0x18] sm:$0xff]
      %v627 = vld [vmem:[#allocation2 + $0x30] sm:$0x3f]
      %v628 = vld [vmem:[%s3 + $0x2a] sm:$0xff]
      %v629 = vld [vmem:[%s3 + $0x32] sm:$0xff]
      %v630 = vld [vmem:[%s3 + $0x3a] sm:$0x3f]
      %v631 = vadd.s32 %v628, 6
      %v632 = vadd.s32 %v629, 6
      %v633 = vadd.s32 %v630, 6
      %vm634 = vcmp.ge.s32.totalorder %v631, 0
      %vm635 = vcmp.ge.s32.totalorder %v632, 0
      %vm636 = vcmp.ge.s32.totalorder %v633, 0
      %vm637 = vcmp.lt.s32.totalorder %v631, 8
      %vm638 = vcmp.lt.s32.totalorder %v632, 8
      %vm639 = vcmp.lt.s32.totalorder %v633, 8
      %vm640 = vmand %vm634, %vm637
      %vm641 = vmand %vm635, %vm638
      %vm642 = vmand %vm636, %vm639
      %v643 = vsel %vm640, 1, 0
      %v644 = vsel %vm641, 1, 0
      %v645 = vsel %vm642, 1, 0
      %646 = vset.pattern.permute.xlu0 0
      %647 = vperm.xlu0 %646, %v643
      %v648 = vpop.permute.xlu0 %647
      %649 = vset.pattern.permute.xlu0 0
      %650 = vperm.xlu0 %649, %v644
      %v651 = vpop.permute.xlu0 %650
      %652 = vset.pattern.permute.xlu0 0
      %653 = vperm.xlu0 %652, %v645
      %v654 = vpop.permute.xlu0 %653
      %vm655 = vcmp.eq.s32.totalorder %v648, 1
      %vm656 = vcmp.eq.s32.totalorder %v651, 1
      %vm657 = vcmp.eq.s32.totalorder %v654, 1
      %v658 = vsel %vm655, %v625, 0.0
      %v659 = vsel %vm656, %v626, 0.0
      %v660 = vsel %vm657, %v627, 0.0
      %v661 = vld [vmem:[#allocation3 + $0x2a] sm:$0xff]
      %v662 = vld [vmem:[#allocation3 + $0x32] sm:$0xff]
      %v663 = vld [vmem:[#allocation3 + $0x3a] sm:$0x3f]
      %667 = vrot.lane.b32.xlu0 %v658, 96
      %v668 = vpop.permute.xlu0 %667
      %669 = vrot.lane.b32.xlu0 %v659, 96
      %v670 = vpop.permute.xlu0 %669
      %671 = vrot.lane.b32.xlu0 %v660, 96
      %v672 = vpop.permute.xlu0 %671
      %v676 = vadd.f32 %v661, %v668
      %v677 = vadd.f32 %v662, %v670
      %v678 = vadd.f32 %v663, %v672
      %679 = vst.msk [vmem:[#allocation3 + $0x2a] sm:$0xff] %vm569, %v676
      %680 = vst.msk [vmem:[#allocation3 + $0x32] sm:$0xff] %vm569, %v677
      %vm681 = vcmask 128000
      %682 = vst.msk [vmem:[#allocation3 + $0x3a] sm:$0x3f] %vm681, %v678
      %v683 = vld [vmem:[#allocation2] sm:$0xff]
      %v684 = vld [vmem:[#allocation2 + $0x18] sm:$0xff]
      %v685 = vld [vmem:[#allocation2 + $0x30] sm:$0xff]
      %v686 = vld [vmem:[#allocation2 + $0x48] sm:$0xff]
      %v687 = vld [vmem:[#allocation2 + $0x60] sm:$0xff]
      %v688 = vld [vmem:[#allocation2 + $0x78] sm:$0xff]
      %v689 = vld [vmem:[#allocation2 + $0x90] sm:$0xff]
      %v690 = vld [vmem:[#allocation2 + $0xa8] sm:$0x3]
      %v691 = vld [vmem:[%s3 + $0x6] sm:$0xff]
      %v692 = vld [vmem:[%s3 + $0xe] sm:$0xff]
      %v693 = vld [vmem:[%s3 + $0x16] sm:$0xff]
      %v694 = vld [vmem:[%s3 + $0x1e] sm:$0xff]
      %v695 = vld [vmem:[%s3 + $0x26] sm:$0xff]
      %v696 = vld [vmem:[%s3 + $0x2e] sm:$0xff]
      %v697 = vld [vmem:[%s3 + $0x36] sm:$0xff]
      %v698 = vld [vmem:[%s3 + $0x3e] sm:$0x3]
      %v699 = vadd.s32 %v691, 4294967290
      %v700 = vadd.s32 %v692, 4294967290
      %v701 = vadd.s32 %v693, 4294967290
      %v702 = vadd.s32 %v694, 4294967290
      %v703 = vadd.s32 %v695, 4294967290
      %v704 = vadd.s32 %v696, 4294967290
      %v705 = vadd.s32 %v697, 4294967290
      %v706 = vadd.s32 %v698, 4294967290
      %vm707 = vcmp.ge.s32.totalorder %v699, 0
      %vm708 = vcmp.ge.s32.totalorder %v700, 0
      %vm709 = vcmp.ge.s32.totalorder %v701, 0
      %vm710 = vcmp.ge.s32.totalorder %v702, 0
      %vm711 = vcmp.ge.s32.totalorder %v703, 0
      %vm712 = vcmp.ge.s32.totalorder %v704, 0
      %vm713 = vcmp.ge.s32.totalorder %v705, 0
      %vm714 = vcmp.ge.s32.totalorder %v706, 0
      %vm715 = vcmp.lt.s32.totalorder %v699, 8
      %vm716 = vcmp.lt.s32.totalorder %v700, 8
      %vm717 = vcmp.lt.s32.totalorder %v701, 8
      %vm718 = vcmp.lt.s32.totalorder %v702, 8
      %vm719 = vcmp.lt.s32.totalorder %v703, 8
      %vm720 = vcmp.lt.s32.totalorder %v704, 8
      %vm721 = vcmp.lt.s32.totalorder %v705, 8
      %vm722 = vcmp.lt.s32.totalorder %v706, 8
      %vm723 = vmand %vm707, %vm715
      %vm724 = vmand %vm708, %vm716
      %vm725 = vmand %vm709, %vm717
      %vm726 = vmand %vm710, %vm718
      %vm727 = vmand %vm711, %vm719
      %vm728 = vmand %vm712, %vm720
      %vm729 = vmand %vm713, %vm721
      %vm730 = vmand %vm714, %vm722
      %v731 = vsel %vm723, 1, 0
      %v732 = vsel %vm724, 1, 0
      %v733 = vsel %vm725, 1, 0
      %v734 = vsel %vm726, 1, 0
      %v735 = vsel %vm727, 1, 0
      %v736 = vsel %vm728, 1, 0
      %v737 = vsel %vm729, 1, 0
      %v738 = vsel %vm730, 1, 0
      %739 = vset.pattern.permute.xlu0 0
      %740 = vperm.xlu0 %739, %v731
      %v741 = vpop.permute.xlu0 %740
      %742 = vset.pattern.permute.xlu0 0
      %743 = vperm.xlu0 %742, %v732
      %v744 = vpop.permute.xlu0 %743
      %745 = vset.pattern.permute.xlu0 0
      %746 = vperm.xlu0 %745, %v733
      %v747 = vpop.permute.xlu0 %746
      %748 = vset.pattern.permute.xlu0 0
      %749 = vperm.xlu0 %748, %v734
      %v750 = vpop.permute.xlu0 %749
      %751 = vset.pattern.permute.xlu0 0
      %752 = vperm.xlu0 %751, %v735
      %v753 = vpop.permute.xlu0 %752
      %754 = vset.pattern.permute.xlu0 0
      %755 = vperm.xlu0 %754, %v736
      %v756 = vpop.permute.xlu0 %755
      %757 = vset.pattern.permute.xlu0 0
      %758 = vperm.xlu0 %757, %v737
      %v759 = vpop.permute.xlu0 %758
      %760 = vset.pattern.permute.xlu0 0
      %761 = vperm.xlu0 %760, %v738
      %v762 = vpop.permute.xlu0 %761
      %vm763 = vcmp.eq.s32.totalorder %v741, 1
      %vm764 = vcmp.eq.s32.totalorder %v744, 1
      %vm765 = vcmp.eq.s32.totalorder %v747, 1
      %vm766 = vcmp.eq.s32.totalorder %v750, 1
      %vm767 = vcmp.eq.s32.totalorder %v753, 1
      %vm768 = vcmp.eq.s32.totalorder %v756, 1
      %vm769 = vcmp.eq.s32.totalorder %v759, 1
      %vm770 = vcmp.eq.s32.totalorder %v762, 1
      %v771 = vsel %vm763, %v683, 0.0
      %v772 = vsel %vm764, %v684, 0.0
      %v773 = vsel %vm765, %v685, 0.0
      %v774 = vsel %vm766, %v686, 0.0
      %v775 = vsel %vm767, %v687, 0.0
      %v776 = vsel %vm768, %v688, 0.0
      %v777 = vsel %vm769, %v689, 0.0
      %v778 = vsel %vm770, %v690, 0.0
      %v779 = vld [vmem:[#allocation3 + $0x6] sm:$0xff]
      %v780 = vld [vmem:[#allocation3 + $0xe] sm:$0xff]
      %v781 = vld [vmem:[#allocation3 + $0x16] sm:$0xff]
      %v782 = vld [vmem:[#allocation3 + $0x1e] sm:$0xff]
      %v783 = vld [vmem:[#allocation3 + $0x26] sm:$0xff]
      %v784 = vld [vmem:[#allocation3 + $0x2e] sm:$0xff]
      %v785 = vld [vmem:[#allocation3 + $0x36] sm:$0xff]
      %v786 = vld [vmem:[#allocation3 + $0x3e] sm:$0x3]
      %795 = vrot.lane.b32.xlu0 %v771, 80
      %v796 = vpop.permute.xlu0 %795
      %797 = vrot.lane.b32.xlu0 %v772, 80
      %v798 = vpop.permute.xlu0 %797
      %799 = vrot.lane.b32.xlu0 %v773, 80
      %v800 = vpop.permute.xlu0 %799
      %801 = vrot.lane.b32.xlu0 %v774, 80
      %v802 = vpop.permute.xlu0 %801
      %803 = vrot.lane.b32.xlu0 %v775, 80
      %v804 = vpop.permute.xlu0 %803
      %805 = vrot.lane.b32.xlu0 %v776, 80
      %v806 = vpop.permute.xlu0 %805
      %807 = vrot.lane.b32.xlu0 %v777, 80
      %v808 = vpop.permute.xlu0 %807
      %809 = vrot.lane.b32.xlu0 %v778, 80
      %v810 = vpop.permute.xlu0 %809
      %v819 = vadd.f32 %v779, %v796
      %v820 = vadd.f32 %v780, %v798
      %v821 = vadd.f32 %v781, %v800
      %v822 = vadd.f32 %v782, %v802
      %v823 = vadd.f32 %v783, %v804
      %v824 = vadd.f32 %v784, %v806
      %v825 = vadd.f32 %v785, %v808
      %v826 = vadd.f32 %v786, %v810
      %827 = vst.msk [vmem:[#allocation3 + $0x6] sm:$0xff] %vm569, %v819
      %828 = vst.msk [vmem:[#allocation3 + $0xe] sm:$0xff] %vm569, %v820
      %829 = vst.msk [vmem:[#allocation3 + $0x16] sm:$0xff] %vm569, %v821
      %830 = vst.msk [vmem:[#allocation3 + $0x1e] sm:$0xff] %vm569, %v822
      %831 = vst.msk [vmem:[#allocation3 + $0x26] sm:$0xff] %vm569, %v823
      %832 = vst.msk [vmem:[#allocation3 + $0x2e] sm:$0xff] %vm569, %v824
      %833 = vst.msk [vmem:[#allocation3 + $0x36] sm:$0xff] %vm569, %v825
      %834 = vst.msk [vmem:[#allocation3 + $0x3e] sm:$0x3] %vm607, %v826
      %v835 = vld [vmem:[#allocation2] sm:$0xff]
      %v836 = vld [vmem:[#allocation2 + $0x18] sm:$0xff]
      %v837 = vld [vmem:[#allocation2 + $0x30] sm:$0xff]
      %v838 = vld [vmem:[#allocation2 + $0x48] sm:$0xff]
      %v839 = vld [vmem:[#allocation2 + $0x60] sm:$0xff]
      %v840 = vld [vmem:[#allocation2 + $0x78] sm:$0xff]
      %v841 = vld [vmem:[#allocation2 + $0x90] sm:$0xff]
      %v842 = vld [vmem:[#allocation2 + $0xa8] sm:$0xff]
      %v843 = vld [vmem:[#allocation3] sm:$0xff]
      %v844 = vld [vmem:[#allocation3 + $0x8] sm:$0xff]
      %v845 = vld [vmem:[#allocation3 + $0x10] sm:$0xff]
      %v846 = vld [vmem:[#allocation3 + $0x18] sm:$0xff]
      %v847 = vld [vmem:[#allocation3 + $0x20] sm:$0xff]
      %v848 = vld [vmem:[#allocation3 + $0x28] sm:$0xff]
      %v849 = vld [vmem:[#allocation3 + $0x30] sm:$0xff]
      %v850 = vld [vmem:[#allocation3 + $0x38] sm:$0xff]
      %859 = vrot.lane.b32.xlu0 %v835, 64
      %v860 = vpop.permute.xlu0 %859
      %861 = vrot.lane.b32.xlu0 %v836, 64
      %v862 = vpop.permute.xlu0 %861
      %863 = vrot.lane.b32.xlu0 %v837, 64
      %v864 = vpop.permute.xlu0 %863
      %865 = vrot.lane.b32.xlu0 %v838, 64
      %v866 = vpop.permute.xlu0 %865
      %867 = vrot.lane.b32.xlu0 %v839, 64
      %v868 = vpop.permute.xlu0 %867
      %869 = vrot.lane.b32.xlu0 %v840, 64
      %v870 = vpop.permute.xlu0 %869
      %871 = vrot.lane.b32.xlu0 %v841, 64
      %v872 = vpop.permute.xlu0 %871
      %873 = vrot.lane.b32.xlu0 %v842, 64
      %v874 = vpop.permute.xlu0 %873
      %v883 = vadd.f32 %v843, %v860
      %v884 = vadd.f32 %v844, %v862
      %v885 = vadd.f32 %v845, %v864
      %v886 = vadd.f32 %v846, %v866
      %v887 = vadd.f32 %v847, %v868
      %v888 = vadd.f32 %v848, %v870
      %v889 = vadd.f32 %v849, %v872
      %v890 = vadd.f32 %v850, %v874
      %891 = vst.msk [vmem:[#allocation3] sm:$0xff] %vm569, %v883
      %892 = vst.msk [vmem:[#allocation3 + $0x8] sm:$0xff] %vm569, %v884
      %893 = vst.msk [vmem:[#allocation3 + $0x10] sm:$0xff] %vm569, %v885
      %894 = vst.msk [vmem:[#allocation3 + $0x18] sm:$0xff] %vm569, %v886
      %895 = vst.msk [vmem:[#allocation3 + $0x20] sm:$0xff] %vm569, %v887
      %896 = vst.msk [vmem:[#allocation3 + $0x28] sm:$0xff] %vm569, %v888
      %897 = vst.msk [vmem:[#allocation3 + $0x30] sm:$0xff] %vm569, %v889
      %898 = vst.msk [vmem:[#allocation3 + $0x38] sm:$0xff] %vm569, %v890
      %v899 = vld [vmem:[#allocation2] sm:$0xc0]
      %v900 = vld [vmem:[#allocation2 + $0x18] sm:$0xff]
      %v901 = vld [vmem:[#allocation2 + $0x30] sm:$0xff]
      %v902 = vld [vmem:[#allocation2 + $0x48] sm:$0xff]
      %v903 = vld [vmem:[#allocation2 + $0x60] sm:$0xff]
      %v904 = vld [vmem:[#allocation2 + $0x78] sm:$0xff]
      %v905 = vld [vmem:[#allocation2 + $0x90] sm:$0xff]
      %v906 = vld [vmem:[#allocation2 + $0xa8] sm:$0xff]
      %v907 = vld [vmem:[%s3] sm:$0xff]
      %v908 = vld [vmem:[%s3 + $0x8] sm:$0xff]
      %v909 = vld [vmem:[%s3 + $0x10] sm:$0xff]
      %v910 = vld [vmem:[%s3 + $0x18] sm:$0xff]
      %v911 = vld [vmem:[%s3 + $0x20] sm:$0xff]
      %v912 = vld [vmem:[%s3 + $0x28] sm:$0xff]
      %v913 = vld [vmem:[%s3 + $0x30] sm:$0xff]
      %v914 = vld [vmem:[%s3 + $0x38] sm:$0x3]
      %v915 = vadd.s32 %v907, 6
      %v916 = vadd.s32 %v908, 6
      %v917 = vadd.s32 %v909, 6
      %v918 = vadd.s32 %v910, 6
      %v919 = vadd.s32 %v911, 6
      %v920 = vadd.s32 %v912, 6
      %v921 = vadd.s32 %v913, 6
      %v922 = vadd.s32 %v914, 6
      %vm923 = vcmp.ge.s32.totalorder %v915, 0
      %vm924 = vcmp.ge.s32.totalorder %v916, 0
      %vm925 = vcmp.ge.s32.totalorder %v917, 0
      %vm926 = vcmp.ge.s32.totalorder %v918, 0
      %vm927 = vcmp.ge.s32.totalorder %v919, 0
      %vm928 = vcmp.ge.s32.totalorder %v920, 0
      %vm929 = vcmp.ge.s32.totalorder %v921, 0
      %vm930 = vcmp.ge.s32.totalorder %v922, 0
      %vm931 = vcmp.lt.s32.totalorder %v915, 8
      %vm932 = vcmp.lt.s32.totalorder %v916, 8
      %vm933 = vcmp.lt.s32.totalorder %v917, 8
      %vm934 = vcmp.lt.s32.totalorder %v918, 8
      %vm935 = vcmp.lt.s32.totalorder %v919, 8
      %vm936 = vcmp.lt.s32.totalorder %v920, 8
      %vm937 = vcmp.lt.s32.totalorder %v921, 8
      %vm938 = vcmp.lt.s32.totalorder %v922, 8
      %vm939 = vmand %vm923, %vm931
      %vm940 = vmand %vm924, %vm932
      %vm941 = vmand %vm925, %vm933
      %vm942 = vmand %vm926, %vm934
      %vm943 = vmand %vm927, %vm935
      %vm944 = vmand %vm928, %vm936
      %vm945 = vmand %vm929, %vm937
      %vm946 = vmand %vm930, %vm938
      %v947 = vsel %vm939, 1, 0
      %v948 = vsel %vm940, 1, 0
      %v949 = vsel %vm941, 1, 0
      %v950 = vsel %vm942, 1, 0
      %v951 = vsel %vm943, 1, 0
      %v952 = vsel %vm944, 1, 0
      %v953 = vsel %vm945, 1, 0
      %v954 = vsel %vm946, 1, 0
      %955 = vset.pattern.permute.xlu0 0
      %956 = vperm.xlu0 %955, %v947
      %v957 = vpop.permute.xlu0 %956
      %958 = vset.pattern.permute.xlu0 0
      %959 = vperm.xlu0 %958, %v948
      %v960 = vpop.permute.xlu0 %959
      %961 = vset.pattern.permute.xlu0 0
      %962 = vperm.xlu0 %961, %v949
      %v963 = vpop.permute.xlu0 %962
      %964 = vset.pattern.permute.xlu0 0
      %965 = vperm.xlu0 %964, %v950
      %v966 = vpop.permute.xlu0 %965
      %967 = vset.pattern.permute.xlu0 0
      %968 = vperm.xlu0 %967, %v951
      %v969 = vpop.permute.xlu0 %968
      %970 = vset.pattern.permute.xlu0 0
      %971 = vperm.xlu0 %970, %v952
      %v972 = vpop.permute.xlu0 %971
      %973 = vset.pattern.permute.xlu0 0
      %974 = vperm.xlu0 %973, %v953
      %v975 = vpop.permute.xlu0 %974
      %976 = vset.pattern.permute.xlu0 0
      %977 = vperm.xlu0 %976, %v954
      %v978 = vpop.permute.xlu0 %977
      %vm979 = vcmp.eq.s32.totalorder %v957, 1
      %vm980 = vcmp.eq.s32.totalorder %v960, 1
      %vm981 = vcmp.eq.s32.totalorder %v963, 1
      %vm982 = vcmp.eq.s32.totalorder %v966, 1
      %vm983 = vcmp.eq.s32.totalorder %v969, 1
      %vm984 = vcmp.eq.s32.totalorder %v972, 1
      %vm985 = vcmp.eq.s32.totalorder %v975, 1
      %vm986 = vcmp.eq.s32.totalorder %v978, 1
      %vm995 = vcmask 1041408
      %v996 = vrot.slane %v899, 6
      %v997 = vrot.slane %v900, 6
      %v998 = vsel %vm995, %v996, %v997
      %v999 = vrot.slane %v901, 6
      %v1000 = vsel %vm995, %v997, %v999
      %v1001 = vrot.slane %v902, 6
      %v1002 = vsel %vm995, %v999, %v1001
      %v1003 = vrot.slane %v903, 6
      %v1004 = vsel %vm995, %v1001, %v1003
      %v1005 = vrot.slane %v904, 6
      %v1006 = vsel %vm995, %v1003, %v1005
      %v1007 = vrot.slane %v905, 6
      %v1008 = vsel %vm995, %v1005, %v1007
      %v1009 = vrot.slane %v906, 6
      %v1010 = vsel %vm995, %v1007, %v1009
      %1011 = vrot.lane.b32.xlu0 %v998, 48
      %v1012 = vpop.permute.xlu0 %1011
      %1013 = vrot.lane.b32.xlu0 %v1000, 48
      %v1014 = vpop.permute.xlu0 %1013
      %1015 = vrot.lane.b32.xlu0 %v1002, 48
      %v1016 = vpop.permute.xlu0 %1015
      %1017 = vrot.lane.b32.xlu0 %v1004, 48
      %v1018 = vpop.permute.xlu0 %1017
      %1019 = vrot.lane.b32.xlu0 %v1006, 48
      %v1020 = vpop.permute.xlu0 %1019
      %1021 = vrot.lane.b32.xlu0 %v1008, 48
      %v1022 = vpop.permute.xlu0 %1021
      %1023 = vrot.lane.b32.xlu0 %v1010, 48
      %v1024 = vpop.permute.xlu0 %1023
      %1025 = vrot.lane.b32.xlu0 %v1009, 48
      %v1026 = vpop.permute.xlu0 %1025
      %v1035 = vsel %vm979, %v1012, 0.0
      %v1036 = vsel %vm980, %v1014, 0.0
      %v1037 = vsel %vm981, %v1016, 0.0
      %v1038 = vsel %vm982, %v1018, 0.0
      %v1039 = vsel %vm983, %v1020, 0.0
      %v1040 = vsel %vm984, %v1022, 0.0
      %v1041 = vsel %vm985, %v1024, 0.0
      %v1042 = vsel %vm986, %v1026, 0.0
      %v1043 = vld [vmem:[#allocation3] sm:$0xff]
      %v1044 = vld [vmem:[#allocation3 + $0x8] sm:$0xff]
      %v1045 = vld [vmem:[#allocation3 + $0x10] sm:$0xff]
      %v1046 = vld [vmem:[#allocation3 + $0x18] sm:$0xff]
      %v1047 = vld [vmem:[#allocation3 + $0x20] sm:$0xff]
      %v1048 = vld [vmem:[#allocation3 + $0x28] sm:$0xff]
      %v1049 = vld [vmem:[#allocation3 + $0x30] sm:$0xff]
      %v1050 = vld [vmem:[#allocation3 + $0x38] sm:$0x3]
      %v1051 = vadd.f32 %v1043, %v1035
      %v1052 = vadd.f32 %v1044, %v1036
      %v1053 = vadd.f32 %v1045, %v1037
      %v1054 = vadd.f32 %v1046, %v1038
      %v1055 = vadd.f32 %v1047, %v1039
      %v1056 = vadd.f32 %v1048, %v1040
      %v1057 = vadd.f32 %v1049, %v1041
      %v1058 = vadd.f32 %v1050, %v1042
      %1059 = vst.msk [vmem:[#allocation3] sm:$0xff] %vm569, %v1051
      %1060 = vst.msk [vmem:[#allocation3 + $0x8] sm:$0xff] %vm569, %v1052
      %1061 = vst.msk [vmem:[#allocation3 + $0x10] sm:$0xff] %vm569, %v1053
      %1062 = vst.msk [vmem:[#allocation3 + $0x18] sm:$0xff] %vm569, %v1054
      %1063 = vst.msk [vmem:[#allocation3 + $0x20] sm:$0xff] %vm569, %v1055
      %1064 = vst.msk [vmem:[#allocation3 + $0x28] sm:$0xff] %vm569, %v1056
      %1065 = vst.msk [vmem:[#allocation3 + $0x30] sm:$0xff] %vm569, %v1057
      %1066 = vst.msk [vmem:[#allocation3 + $0x38] sm:$0x3] %vm607, %v1058
      %v1067 = vld [vmem:[#allocation2 + $0x78] sm:$0xfc]
      %v1068 = vld [vmem:[#allocation2 + $0x90] sm:$0xff]
      %v1069 = vld [vmem:[#allocation2 + $0xa8] sm:$0xff]
      %v1070 = vld [vmem:[%s3] sm:$0xff]
      %v1071 = vld [vmem:[%s3 + $0x8] sm:$0xff]
      %v1072 = vld [vmem:[%s3 + $0x10] sm:$0x3f]
      %v1073 = vadd.s32 %v1070, 4294967290
      %v1074 = vadd.s32 %v1071, 4294967290
      %v1075 = vadd.s32 %v1072, 4294967290
      %vm1076 = vcmp.ge.s32.totalorder %v1073, 0
      %vm1077 = vcmp.ge.s32.totalorder %v1074, 0
      %vm1078 = vcmp.ge.s32.totalorder %v1075, 0
      %vm1079 = vcmp.lt.s32.totalorder %v1073, 8
      %vm1080 = vcmp.lt.s32.totalorder %v1074, 8
      %vm1081 = vcmp.lt.s32.totalorder %v1075, 8
      %vm1082 = vmand %vm1076, %vm1079
      %vm1083 = vmand %vm1077, %vm1080
      %vm1084 = vmand %vm1078, %vm1081
      %v1085 = vsel %vm1082, 1, 0
      %v1086 = vsel %vm1083, 1, 0
      %v1087 = vsel %vm1084, 1, 0
      %1088 = vset.pattern.permute.xlu0 0
      %1089 = vperm.xlu0 %1088, %v1085
      %v1090 = vpop.permute.xlu0 %1089
      %1091 = vset.pattern.permute.xlu0 0
      %1092 = vperm.xlu0 %1091, %v1086
      %v1093 = vpop.permute.xlu0 %1092
      %1094 = vset.pattern.permute.xlu0 0
      %1095 = vperm.xlu0 %1094, %v1087
      %v1096 = vpop.permute.xlu0 %1095
      %vm1097 = vcmp.eq.s32.totalorder %v1090, 1
      %vm1098 = vcmp.eq.s32.totalorder %v1093, 1
      %vm1099 = vcmp.eq.s32.totalorder %v1096, 1
      %vm1103 = vcmask 1045504
      %v1104 = vrot.slane %v1067, 2
      %v1105 = vrot.slane %v1068, 2
      %v1106 = vsel %vm1103, %v1104, %v1105
      %v1107 = vrot.slane %v1069, 2
      %v1108 = vsel %vm1103, %v1105, %v1107
      %1109 = vrot.lane.b32.xlu0 %v1106, 32
      %v1110 = vpop.permute.xlu0 %1109
      %1111 = vrot.lane.b32.xlu0 %v1108, 32
      %v1112 = vpop.permute.xlu0 %1111
      %1113 = vrot.lane.b32.xlu0 %v1107, 32
      %v1114 = vpop.permute.xlu0 %1113
      %v1118 = vsel %vm1097, %v1110, 0.0
      %v1119 = vsel %vm1098, %v1112, 0.0
      %v1120 = vsel %vm1099, %v1114, 0.0
      %v1121 = vld [vmem:[#allocation3] sm:$0xff]
      %v1122 = vld [vmem:[#allocation3 + $0x8] sm:$0xff]
      %v1123 = vld [vmem:[#allocation3 + $0x10] sm:$0x3f]
      %v1124 = vadd.f32 %v1121, %v1118
      %v1125 = vadd.f32 %v1122, %v1119
      %v1126 = vadd.f32 %v1123, %v1120
      %1127 = vst.msk [vmem:[#allocation3] sm:$0xff] %vm569, %v1124
      %1128 = vst.msk [vmem:[#allocation3 + $0x8] sm:$0xff] %vm569, %v1125
      %1129 = vst.msk [vmem:[#allocation3 + $0x10] sm:$0x3f] %vm681, %v1126
      %v1130 = vld [vmem:[#allocation2 + $0x90] sm:$0xff]
      %v1131 = vld [vmem:[#allocation2 + $0xa8] sm:$0xff]
      %v1132 = vld [vmem:[#allocation3] sm:$0xff]
      %v1133 = vld [vmem:[#allocation3 + $0x8] sm:$0xff]
      %1136 = vrot.lane.b32.xlu0 %v1130, 16
      %v1137 = vpop.permute.xlu0 %1136
      %1138 = vrot.lane.b32.xlu0 %v1131, 16
      %v1139 = vpop.permute.xlu0 %1138
      %v1142 = vadd.f32 %v1132, %v1137
      %v1143 = vadd.f32 %v1133, %v1139
      %1144 = vst.msk [vmem:[#allocation3] sm:$0xff] %vm569, %v1142
      %1145 = vst.msk [vmem:[#allocation3 + $0x8] sm:$0xff] %vm569, %v1143
      %v1146 = vld [vmem:[#allocation2 + $0x98] sm:$0xc0]
      %v1147 = vld [vmem:[#allocation2 + $0xb0] sm:$0xff]
      %v1148 = vld [vmem:[%s3] sm:$0xff]
      %v1149 = vld [vmem:[%s3 + $0x8] sm:$0x3]
      %v1150 = vadd.s32 %v1148, 6
      %v1151 = vadd.s32 %v1149, 6
      %vm1152 = vcmp.ge.s32.totalorder %v1150, 0
      %vm1153 = vcmp.ge.s32.totalorder %v1151, 0
      %vm1154 = vcmp.lt.s32.totalorder %v1150, 8
      %vm1155 = vcmp.lt.s32.totalorder %v1151, 8
      %vm1156 = vmand %vm1152, %vm1154
      %vm1157 = vmand %vm1153, %vm1155
      %v1158 = vsel %vm1156, 1, 0
      %v1159 = vsel %vm1157, 1, 0
      %1160 = vset.pattern.permute.xlu0 0
      %1161 = vperm.xlu0 %1160, %v1158
      %v1162 = vpop.permute.xlu0 %1161
      %1163 = vset.pattern.permute.xlu0 0
      %1164 = vperm.xlu0 %1163, %v1159
      %v1165 = vpop.permute.xlu0 %1164
      %vm1166 = vcmp.eq.s32.totalorder %v1162, 1
      %vm1167 = vcmp.eq.s32.totalorder %v1165, 1
      %v1170 = vrot.slane %v1146, 6
      %v1171 = vrot.slane %v1147, 6
      %v1172 = vsel %vm995, %v1170, %v1171
      %v1175 = vsel %vm1166, %v1172, 0.0
      %v1176 = vsel %vm1167, %v1171, 0.0
      %v1177 = vld [vmem:[#allocation3] sm:$0xff]
      %v1178 = vld [vmem:[#allocation3 + $0x8] sm:$0x3]
      %v1179 = vadd.f32 %v1177, %v1175
      %v1180 = vadd.f32 %v1178, %v1176
      %1181 = vst.msk [vmem:[#allocation3] sm:$0xff] %vm569, %v1179
      %1182 = vst.msk [vmem:[#allocation3 + $0x8] sm:$0x3] %vm607, %v1180
      %v1183 = vld [vmem:[#allocation2 + $0x8] sm:$0xff]
      %v1184 = vld [vmem:[#allocation2 + $0x20] sm:$0xff]
      %v1185 = vld [vmem:[#allocation2 + $0x38] sm:$0xff]
      %v1186 = vld [vmem:[#allocation2 + $0x50] sm:$0xff]
      %v1187 = vld [vmem:[#allocation2 + $0x68] sm:$0xff]
      %v1188 = vld [vmem:[#allocation2 + $0x80] sm:$0xff]
      %v1189 = vld [vmem:[#allocation2 + $0x98] sm:$0xff]
      %v1190 = vld [vmem:[#allocation2 + $0xb0] sm:$0xff]
      %v1191 = vld [vmem:[#allocation3] sm:$0xff]
      %v1192 = vld [vmem:[#allocation3 + $0x8] sm:$0xff]
      %v1193 = vld [vmem:[#allocation3 + $0x10] sm:$0xff]
      %v1194 = vld [vmem:[#allocation3 + $0x18] sm:$0xff]
      %v1195 = vld [vmem:[#allocation3 + $0x20] sm:$0xff]
      %v1196 = vld [vmem:[#allocation3 + $0x28] sm:$0xff]
      %v1197 = vld [vmem:[#allocation3 + $0x30] sm:$0xff]
      %v1198 = vld [vmem:[#allocation3 + $0x38] sm:$0xff]
      %1207 = vrot.lane.b32.xlu0 %v1183, 48
      %v1208 = vpop.permute.xlu0 %1207
      %1209 = vrot.lane.b32.xlu0 %v1184, 48
      %v1210 = vpop.permute.xlu0 %1209
      %1211 = vrot.lane.b32.xlu0 %v1185, 48
      %v1212 = vpop.permute.xlu0 %1211
      %1213 = vrot.lane.b32.xlu0 %v1186, 48
      %v1214 = vpop.permute.xlu0 %1213
      %1215 = vrot.lane.b32.xlu0 %v1187, 48
      %v1216 = vpop.permute.xlu0 %1215
      %1217 = vrot.lane.b32.xlu0 %v1188, 48
      %v1218 = vpop.permute.xlu0 %1217
      %1219 = vrot.lane.b32.xlu0 %v1189, 48
      %v1220 = vpop.permute.xlu0 %1219
      %1221 = vrot.lane.b32.xlu0 %v1190, 48
      %v1222 = vpop.permute.xlu0 %1221
      %v1231 = vadd.f32 %v1191, %v1208
      %v1232 = vadd.f32 %v1192, %v1210
      %v1233 = vadd.f32 %v1193, %v1212
      %v1234 = vadd.f32 %v1194, %v1214
      %v1235 = vadd.f32 %v1195, %v1216
      %v1236 = vadd.f32 %v1196, %v1218
      %v1237 = vadd.f32 %v1197, %v1220
      %v1238 = vadd.f32 %v1198, %v1222
      %1239 = vst.msk [vmem:[#allocation3] sm:$0xff] %vm569, %v1231
      %1240 = vst.msk [vmem:[#allocation3 + $0x8] sm:$0xff] %vm569, %v1232
      %1241 = vst.msk [vmem:[#allocation3 + $0x10] sm:$0xff] %vm569, %v1233
      %1242 = vst.msk [vmem:[#allocation3 + $0x18] sm:$0xff] %vm569, %v1234
      %1243 = vst.msk [vmem:[#allocation3 + $0x20] sm:$0xff] %vm569, %v1235
      %1244 = vst.msk [vmem:[#allocation3 + $0x28] sm:$0xff] %vm569, %v1236
      %1245 = vst.msk [vmem:[#allocation3 + $0x30] sm:$0xff] %vm569, %v1237
      %1246 = vst.msk [vmem:[#allocation3 + $0x38] sm:$0xff] %vm569, %v1238
      %v1247 = vld [vmem:[#allocation3] sm:$0xff]
      %v1248 = vld [vmem:[#allocation3 + $0x8] sm:$0xff]
      %v1249 = vld [vmem:[#allocation3 + $0x10] sm:$0xff]
      %v1250 = vld [vmem:[#allocation3 + $0x18] sm:$0xff]
      %v1251 = vld [vmem:[#allocation3 + $0x20] sm:$0xff]
      %v1252 = vld [vmem:[#allocation3 + $0x28] sm:$0xff]
      %v1253 = vld [vmem:[#allocation3 + $0x30] sm:$0xff]
      %v1254 = vld [vmem:[#allocation3 + $0x38] sm:$0xff]
      %vm1255 = vcmask 64512
      %1256 = vst.msk [vmem:[%s266] sm:$0xff] %vm1255, %v1247
      %1257 = vst.msk [vmem:[%s266 + $0x8] sm:$0xff] %vm1255, %v1248
      %1258 = vst.msk [vmem:[%s266 + $0x10] sm:$0xff] %vm1255, %v1249
      %1259 = vst.msk [vmem:[%s266 + $0x18] sm:$0xff] %vm1255, %v1250
      %1260 = vst.msk [vmem:[%s266 + $0x20] sm:$0xff] %vm1255, %v1251
      %1261 = vst.msk [vmem:[%s266 + $0x28] sm:$0xff] %vm1255, %v1252
      %1262 = vst.msk [vmem:[%s266 + $0x30] sm:$0xff] %vm1255, %v1253
      %1263 = vst.msk [vmem:[%s266 + $0x38] sm:$0xff] %vm1255, %v1254
      %1272 = vrot.lane.b32.xlu0 %v1247, 120
      %v1273 = vpop.permute.xlu0 %1272
      %1274 = vrot.lane.b32.xlu0 %v1248, 120
      %v1275 = vpop.permute.xlu0 %1274
      %1276 = vrot.lane.b32.xlu0 %v1249, 120
      %v1277 = vpop.permute.xlu0 %1276
      %1278 = vrot.lane.b32.xlu0 %v1250, 120
      %v1279 = vpop.permute.xlu0 %1278
      %1280 = vrot.lane.b32.xlu0 %v1251, 120
      %v1281 = vpop.permute.xlu0 %1280
      %1282 = vrot.lane.b32.xlu0 %v1252, 120
      %v1283 = vpop.permute.xlu0 %1282
      %1284 = vrot.lane.b32.xlu0 %v1253, 120
      %v1285 = vpop.permute.xlu0 %1284
      %1286 = vrot.lane.b32.xlu0 %v1254, 120
      %v1287 = vpop.permute.xlu0 %1286
      %1296 = vst.msk [vmem:[%s276] sm:$0xff] %vm1255, %v1273
      %1297 = vst.msk [vmem:[%s276 + $0x8] sm:$0xff] %vm1255, %v1275
      %1298 = vst.msk [vmem:[%s276 + $0x10] sm:$0xff] %vm1255, %v1277
      %1299 = vst.msk [vmem:[%s276 + $0x18] sm:$0xff] %vm1255, %v1279
      %1300 = vst.msk [vmem:[%s276 + $0x20] sm:$0xff] %vm1255, %v1281
      %1301 = vst.msk [vmem:[%s276 + $0x28] sm:$0xff] %vm1255, %v1283
      %1302 = vst.msk [vmem:[%s276 + $0x30] sm:$0xff] %vm1255, %v1285
      %1303 = vst.msk [vmem:[%s276 + $0x38] sm:$0xff] %vm1255, %v1287
      %v1304 = vsel %vm1255, %v1247, -inf
      %1305 = vmax.xlane.f32.xlu0 %v1304
      %v1306 = vpop.xlane.xlu0 %1305
      %v1307 = vsel %vm1255, %v1248, -inf
      %1308 = vmax.xlane.f32.xlu0 %v1307
      %v1309 = vpop.xlane.xlu0 %1308
      %v1310 = vsel %vm1255, %v1249, -inf
      %1311 = vmax.xlane.f32.xlu0 %v1310
      %v1312 = vpop.xlane.xlu0 %1311
      %v1313 = vsel %vm1255, %v1250, -inf
      %1314 = vmax.xlane.f32.xlu0 %v1313
      %v1315 = vpop.xlane.xlu0 %1314
      %v1316 = vsel %vm1255, %v1251, -inf
      %1317 = vmax.xlane.f32.xlu0 %v1316
      %v1318 = vpop.xlane.xlu0 %1317
      %v1319 = vsel %vm1255, %v1252, -inf
      %1320 = vmax.xlane.f32.xlu0 %v1319
      %v1321 = vpop.xlane.xlu0 %1320
      %v1322 = vsel %vm1255, %v1253, -inf
      %1323 = vmax.xlane.f32.xlu0 %v1322
      %v1324 = vpop.xlane.xlu0 %1323
      %v1325 = vsel %vm1255, %v1254, -inf
      %1326 = vmax.xlane.f32.xlu0 %v1325
      %v1327 = vpop.xlane.xlu0 %1326
      %v1328 = vsub.f32 %v1247, %v1306
      %v1329 = vsub.f32 %v1248, %v1309
      %v1330 = vsub.f32 %v1249, %v1312
      %v1331 = vsub.f32 %v1250, %v1315
      %v1332 = vsub.f32 %v1251, %v1318
      %v1333 = vsub.f32 %v1252, %v1321
      %v1334 = vsub.f32 %v1253, %v1324
      %v1335 = vsub.f32 %v1254, %v1327
      %v1336 = vmul.f32 %v1328, 1.442695
      %v1337 = vpow.pop %v1336
      %v1338 = vmul.f32 %v1329, 1.442695
      %v1339 = vpow.pop %v1338
      %v1340 = vmul.f32 %v1330, 1.442695
      %v1341 = vpow.pop %v1340
      %v1342 = vmul.f32 %v1331, 1.442695
      %v1343 = vpow.pop %v1342
      %v1344 = vmul.f32 %v1332, 1.442695
      %v1345 = vpow.pop %v1344
      %v1346 = vmul.f32 %v1333, 1.442695
      %v1347 = vpow.pop %v1346
      %v1348 = vmul.f32 %v1334, 1.442695
      %v1349 = vpow.pop %v1348
      %v1350 = vmul.f32 %v1335, 1.442695
      %v1351 = vpow.pop %v1350
      %v1352 = vsel %vm1255, %v1337, 0.0
      %1353 = vadd.xlane.f32.xlu0 %v1352
      %v1354 = vpop.xlane.xlu0 %1353
      %v1355 = vsel %vm1255, %v1339, 0.0
      %1356 = vadd.xlane.f32.xlu0 %v1355
      %v1357 = vpop.xlane.xlu0 %1356
      %v1358 = vsel %vm1255, %v1341, 0.0
      %1359 = vadd.xlane.f32.xlu0 %v1358
      %v1360 = vpop.xlane.xlu0 %1359
      %v1361 = vsel %vm1255, %v1343, 0.0
      %1362 = vadd.xlane.f32.xlu0 %v1361
      %v1363 = vpop.xlane.xlu0 %1362
      %v1364 = vsel %vm1255, %v1345, 0.0
      %1365 = vadd.xlane.f32.xlu0 %v1364
      %v1366 = vpop.xlane.xlu0 %1365
      %v1367 = vsel %vm1255, %v1347, 0.0
      %1368 = vadd.xlane.f32.xlu0 %v1367
      %v1369 = vpop.xlane.xlu0 %1368
      %v1370 = vsel %vm1255, %v1349, 0.0
      %1371 = vadd.xlane.f32.xlu0 %v1370
      %v1372 = vpop.xlane.xlu0 %1371
      %v1373 = vsel %vm1255, %v1351, 0.0
      %1374 = vadd.xlane.f32.xlu0 %v1373
      %v1375 = vpop.xlane.xlu0 %1374
      %v1376 = vrcp.pop %v1354
      %v1377 = vmul.f32 %v1337, %v1376
      %v1378 = vrcp.pop %v1357
      %v1379 = vmul.f32 %v1339, %v1378
      %v1380 = vrcp.pop %v1360
      %v1381 = vmul.f32 %v1341, %v1380
      %v1382 = vrcp.pop %v1363
      %v1383 = vmul.f32 %v1343, %v1382
      %v1384 = vrcp.pop %v1366
      %v1385 = vmul.f32 %v1345, %v1384
      %v1386 = vrcp.pop %v1369
      %v1387 = vmul.f32 %v1347, %v1386
      %v1388 = vrcp.pop %v1372
      %v1389 = vmul.f32 %v1349, %v1388
      %v1390 = vrcp.pop %v1375
      %v1391 = vmul.f32 %v1351, %v1390
      %1392 = vst.msk [vmem:[%s271] sm:$0xff] %vm1255, %v1377
      %1393 = vst.msk [vmem:[%s271 + $0x8] sm:$0xff] %vm1255, %v1379
      %1394 = vst.msk [vmem:[%s271 + $0x10] sm:$0xff] %vm1255, %v1381
      %1395 = vst.msk [vmem:[%s271 + $0x18] sm:$0xff] %vm1255, %v1383
      %1396 = vst.msk [vmem:[%s271 + $0x20] sm:$0xff] %vm1255, %v1385
      %1397 = vst.msk [vmem:[%s271 + $0x28] sm:$0xff] %vm1255, %v1387
      %1398 = vst.msk [vmem:[%s271 + $0x30] sm:$0xff] %vm1255, %v1389
      %1399 = vst.msk [vmem:[%s271 + $0x38] sm:$0xff] %vm1255, %v1391
      %p1400 = scmp.lt.s32.totalorder %s18, 1
      %s1401 = scalar_select %p1400, %s18, 1
      %s1402 = smul.addr %s1401, 8
      %s1403 = smul.addr %s1402, 8
      %s1404 = scalar_lea.vmem %s4, %s1403
      %p1405 = scmp.lt.s32.totalorder %s18, 1
      %s1406 = scalar_select %p1405, %s18, 1
      %s1407 = smul.addr %s1406, 8
      %s1408 = smul.addr %s1407, 8
      %s1409 = scalar_lea.vmem %s5, %s1408
      %p1410 = scmp.lt.s32.totalorder %s18, 1
      %s1411 = scalar_select %p1410, %s18, 1
      %s1412 = smul.addr %s1411, 8
      %s1413 = smul.addr %s1412, 8
      %s1414 = scalar_lea.vmem %s6, %s1413
      // Predicated region
      $region37: #{mddnet_forward.3} parent=35 // pred_check
        %p1415 = pneg %p125
      $region38: #{mddnet_forward.3} parent=35 // pred_check_branch
        %1417 = sbr.rel (%p1415) target = $region40
      $region39: #{mddnet_forward.3} parent=35 // pred_region
        _
      $region40: #{mddnet_forward.3} parent=35 // pred_fallthru
        _
      // Predicated region
      $region41: #{mddnet_forward.3} parent=35 // pred_check
        %p1418 = pneg %p151
      $region42: #{mddnet_forward.3} parent=35 // pred_check_branch
        %1420 = sbr.rel (%p1418) target = $region44
      $region43: #{mddnet_forward.3} parent=35 // pred_region
        _
      $region44: #{mddnet_forward.3} parent=35 // pred_fallthru
        _
      // Predicated region
      $region45: #{mddnet_forward.3} parent=35 // pred_check
        %p1421 = pneg %p177
      $region46: #{mddnet_forward.3} parent=35 // pred_check_branch
        %1423 = sbr.rel (%p1421) target = $region48
      $region47: #{mddnet_forward.3} parent=35 // pred_region
        _
      $region48: #{mddnet_forward.3} parent=35 // pred_fallthru
        _
    $region36: #{mddnet_forward.3} parent=5 // pred_fallthru
      _
    %p1424 = scmp.le.s32.totalorder 2, %s13
    // Predicated region
    $region49: #{mddnet_forward.3} parent=5 // pred_check
      %p1425 = pneg %p1424
    $region50: #{mddnet_forward.3} parent=5 // pred_check_branch
      %1427 = sbr.rel (%p1425) target = $region52
    $region51: #{mddnet_forward.3} parent=5 // pred_region
      %s1428 = ssub.s32 %s13, 2
      // Predicated region
      $region53: #{mddnet_forward.3} parent=51 // pred_check
        %p1429 = pneg %p131
      $region54: #{mddnet_forward.3} parent=51 // pred_check_branch
        %1431 = sbr.rel (%p1429) target = $region56
      $region55: #{mddnet_forward.3} parent=51 // pred_region
        %p1432 = scmp.lt.s32.totalorder %s19, 1
        %s1433 = scalar_select %p1432, %s19, 1
        %s1434 = smul.addr %s1433, 8
        %s1435 = smul.addr %s1434, 8
        %s1436 = scalar_lea.vmem %s4, %s1435
      $region56: #{mddnet_forward.3} parent=51 // pred_fallthru
        _
      // Predicated region
      $region57: #{mddnet_forward.3} parent=51 // pred_check
        %p1437 = pneg %p157
      $region58: #{mddnet_forward.3} parent=51 // pred_check_branch
        %1439 = sbr.rel (%p1437) target = $region60
      $region59: #{mddnet_forward.3} parent=51 // pred_region
        %p1440 = scmp.lt.s32.totalorder %s19, 1
        %s1441 = scalar_select %p1440, %s19, 1
        %s1442 = smul.addr %s1441, 8
        %s1443 = smul.addr %s1442, 8
        %s1444 = scalar_lea.vmem %s5, %s1443
      $region60: #{mddnet_forward.3} parent=51 // pred_fallthru
        _
      // Predicated region
      $region61: #{mddnet_forward.3} parent=51 // pred_check
        %p1445 = pneg %p183
      $region62: #{mddnet_forward.3} parent=51 // pred_check_branch
        %1447 = sbr.rel (%p1445) target = $region64
      $region63: #{mddnet_forward.3} parent=51 // pred_region
        %p1448 = scmp.lt.s32.totalorder %s19, 1
        %s1449 = scalar_select %p1448, %s19, 1
        %s1450 = smul.addr %s1449, 8
        %s1451 = smul.addr %s1450, 8
        %s1452 = scalar_lea.vmem %s6, %s1451
      $region64: #{mddnet_forward.3} parent=51 // pred_fallthru
        _
    $region52: #{mddnet_forward.3} parent=5 // pred_fallthru
      _
  $region6: #{mddnet_forward.3} parent=0 // loop_footer
    %s17 = sadd.s32 1, %s13
  $region7: #{mddnet_forward.3} parent=0 // loop_footer_branch
    %12 = sbr.rel target = $region3
  $region8: #{mddnet_forward.3} parent=0 // loop_exit
    _

</llo_original>
